<compile_context>
chip_gen: v7x
topology: tpu7x:2x2x1
jax: 0.10.0
libtpu: 0.0.40
codegen_flags: <defaults>
</compile_context>

<pallas_src>
import functools

import jax
import jax.numpy as jnp
from jax.experimental import pallas as pl
from jax.experimental.pallas import tpu as pltpu


# ----------------------------------------------------------------------------
# Fused Pallas kernel: LN -> (1x1 + dw3x3 as one matmul) -> GQA attn -> proj
# ----------------------------------------------------------------------------

def _sgqa_fused_kernel(x_ref, lnw_ref, lnb_ref, wfused_ref, mask_ref,
                       temp_ref, amask_ref, wproj_ref, o_ref, x9_ref,
                       *, C, C_kv, W, HW):
    f32 = jnp.float32
    x = x_ref[0].astype(f32)                                    # (C, HW)

    # --- WithBias LayerNorm over channels (sublane axis), HW stays on lanes ---
    mu = jnp.mean(x, axis=0, keepdims=True)                     # (1, HW)
    xc = x - mu
    var = jnp.mean(xc * xc, axis=0, keepdims=True)              # (1, HW)
    inv_std = jax.lax.rsqrt(var + 1e-5)                         # EUP rsqrt
    xn = xc * inv_std * lnw_ref[...].astype(f32) + lnb_ref[...].astype(f32)

    # --- stack the 9 masked spatial shifts of xn into VMEM (9C, HW) ----------
    # The depthwise-3x3 taps are already folded into wfused on the host, so the
    # whole 1x1-conv + depthwise stage is a single (Cqkv, 9C) @ (9C, HW) matmul.
    t = 0
    for di in (-1, 0, 1):
        for dj in (-1, 0, 1):
            off = di * W + dj
            if off == 0:
                x9_ref[pl.ds(t * C, C), :] = xn
            else:
                shifted = pltpu.roll(xn, shift=(-off) % HW, axis=1)
                x9_ref[pl.ds(t * C, C), :] = shifted * mask_ref[t].astype(f32)
            t += 1

    qkv = jnp.dot(wfused_ref[...].astype(f32), x9_ref[...],
                  preferred_element_type=f32)                    # (Cqkv, HW)

    q = qkv[:C]                                                  # (C,    HW)
    k = qkv[C:C + C_kv]                                          # (C_kv, HW)
    v = qkv[C + C_kv:]                                           # (C_kv, HW)

    # --- raw scores for ALL heads at once (GQA via block-diagonal mask) ------
    s = jax.lax.dot_general(q, k, dimension_numbers=(((1,), (1,)), ((), ())),
                            preferred_element_type=f32)          # (C, C_kv)

    # F.normalize + temperature as exact post-matmul row/column scalings:
    #   diag(temp * 1/||q||) @ (q k^T) @ diag(1/||k||)
    q_ss = jnp.sum(q * q, axis=-1, keepdims=True)                # (C, 1)
    q_inv = 1.0 / jnp.maximum(jnp.sqrt(q_ss), 1e-12)
    ksq = k * k                                                  # (C_kv, HW)
    ones_row = jnp.ones((1, HW), f32)
    k_ss = jax.lax.dot_general(ones_row, ksq,                    # (1, C_kv)
                               dimension_numbers=(((1,), (1,)), ((), ())),
                               preferred_element_type=f32)
    k_inv = 1.0 / jnp.maximum(jnp.sqrt(k_ss), 1e-12)             # (1, C_kv)

    s = s * (q_inv * temp_ref[...].astype(f32))                  # row scale
    s = s * k_inv                                                # column scale
    s = s + amask_ref[...].astype(f32)                           # block-diag mask (pre-softmax)

    # --- softmax over the (masked) key axis ----------------------------------
    s = s - jnp.max(s, axis=-1, keepdims=True)
    e = jnp.exp(s)
    p = e * (1.0 / jnp.sum(e, axis=-1, keepdims=True))           # (C, C_kv)

    out = jnp.dot(p, v, preferred_element_type=f32)              # (C, HW)

    # --- project_out: (C, C) @ (C, HW) ---------------------------------------
    proj = jnp.dot(wproj_ref[...].astype(f32), out, preferred_element_type=f32)
    o_ref[0] = proj.astype(o_ref.dtype)


def sgqa_forward(x, params, num_heads, kv_num_heads):
    b, c, h, w = x.shape
    hw = h * w
    rep = num_heads // kv_num_heads
    dh = c // num_heads
    c_kv = c // rep                        # channels of k (= of v)
    c_qkv = c + 2 * c_kv                   # fused q + kv output channels
    f32 = jnp.float32

    x_flat = x.reshape(b, c, hw)

    # Fused 1x1-conv + depthwise-3x3 weight (host precompute):
    #   W_fused[o, t*C + c] = dw_tap_t[o] * W_qkv[o, c],   t = (di+1)*3 + (dj+1)
    w_qkv = jnp.concatenate([params["wq"], params["wkv"]], axis=0).astype(f32)      # (Cqkv, C)
    w_dw = jnp.concatenate([params["wq_dw"], params["wkv_dw"]], axis=0).astype(f32) # (Cqkv,3,3)
    taps = w_dw.reshape(c_qkv, 9)                                                   # (Cqkv, 9)
    w_fused = (taps[:, :, None] * w_qkv[:, None, :]).reshape(c_qkv, 9 * c)          # (Cqkv, 9C)

    # Edge-validity masks for the 9 taps in flattened (h*W + w) coordinates.
    hh = jnp.arange(h)[:, None]
    ww = jnp.arange(w)[None, :]
    masks = []
    for di in (-1, 0, 1):
        for dj in (-1, 0, 1):
            m = ((hh + di >= 0) & (hh + di < h) &
                 (ww + dj >= 0) & (ww + dj < w))
            masks.append(m.astype(f32).reshape(hw))
    dw_mask = jnp.stack(masks, axis=0).reshape(9, 1, hw)

    # Per-q-row temperature (row r belongs to head r//dh).
    temp_rows = jnp.repeat(params["temperature"].astype(f32), dh).reshape(c, 1)

    # Block-diagonal additive mask: q-row r (head r//dh, group (r//dh)//rep) may
    # only attend to its group's dh key columns.
    row_grp = (jnp.arange(c) // dh) // rep
    col_grp = jnp.arange(c_kv) // dh
    attn_mask = jnp.where(row_grp[:, None] == col_grp[None, :], 0.0, -1e30).astype(f32)

    ln_w = params["ln_w"].reshape(c, 1).astype(f32)
    ln_b = params["ln_b"].reshape(c, 1).astype(f32)
    w_proj = params["wproj"].astype(f32)

    kernel = functools.partial(_sgqa_fused_kernel, C=c, C_kv=c_kv, W=w, HW=hw)

    out = pl.pallas_call(
        kernel,
        out_shape=jax.ShapeDtypeStruct((b, c, hw), x.dtype),
        grid=(b,),
        in_specs=[
            pl.BlockSpec((1, c, hw), lambda i: (i, 0, 0)),       # x
            pl.BlockSpec((c, 1), lambda i: (0, 0)),              # ln_w
            pl.BlockSpec((c, 1), lambda i: (0, 0)),              # ln_b
            pl.BlockSpec((c_qkv, 9 * c), lambda i: (0, 0)),      # fused 1x1+dw weight
            pl.BlockSpec((9, 1, hw), lambda i: (0, 0, 0)),       # tap validity masks
            pl.BlockSpec((c, 1), lambda i: (0, 0)),              # per-row temperature
            pl.BlockSpec((c, c_kv), lambda i: (0, 0)),           # block-diag attn mask
            pl.BlockSpec((c, c), lambda i: (0, 0)),              # project_out weight
        ],
        out_specs=pl.BlockSpec((1, c, hw), lambda i: (i, 0, 0)),
        scratch_shapes=[pltpu.VMEM((9 * c, hw), jnp.float32)],   # stacked shifts
        compiler_params=pltpu.CompilerParams(
            dimension_semantics=("parallel",),
            vmem_limit_bytes=64 * 1024 * 1024),
    )(x_flat, ln_w, ln_b, w_fused, dw_mask, temp_rows, attn_mask, w_proj)

    return out.reshape(b, c, h, w)


# ----------------------------------------------------------------------------
# Pure-JAX reference (for self-check)
# ----------------------------------------------------------------------------

def sgqa_reference(x, params, num_heads, kv_num_heads):
    b, c, h, w = x.shape
    hw = h * w
    rep = num_heads // kv_num_heads
    dh = c // num_heads

    x3 = jnp.transpose(x.reshape(b, c, hw), (0, 2, 1))
    mu = jnp.mean(x3, -1, keepdims=True)
    var = jnp.mean(jnp.square(x3 - mu), -1, keepdims=True)
    xn3 = (x3 - mu) / jnp.sqrt(var + 1e-5) * params["ln_w"] + params["ln_b"]
    xn = jnp.transpose(xn3, (0, 2, 1)).reshape(b, c, h, w)

    def pw(inp, wgt):
        return jnp.einsum("oc,bchw->bohw", wgt, inp)

    def dw(inp, wgt):
        pad = jnp.pad(inp, ((0, 0), (0, 0), (1, 1), (1, 1)))
        out = jnp.zeros_like(inp)
        for ki in range(3):
            for kj in range(3):
                out = out + pad[:, :, ki:ki + h, kj:kj + w] * wgt[None, :, ki, kj, None, None]
        return out

    q = dw(pw(xn, params["wq"]), params["wq_dw"])
    kv = dw(pw(xn, params["wkv"]), params["wkv_dw"])
    k_, v_ = jnp.split(kv, 2, axis=1)

    qh = q.reshape(b, num_heads, dh, hw)
    kh = jnp.repeat(k_.reshape(b, kv_num_heads, dh, hw), rep, axis=1)
    vh = jnp.repeat(v_.reshape(b, kv_num_heads, dh, hw), rep, axis=1)

    qn = qh / jnp.maximum(jnp.linalg.norm(qh, axis=-1, keepdims=True), 1e-12)
    kn = kh / jnp.maximum(jnp.linalg.norm(kh, axis=-1, keepdims=True), 1e-12)
    attn = jnp.einsum("bhcn,bhdn->bhcd", qn, kn) * params["temperature"][None, :, None, None]
    attn = jax.nn.softmax(attn, axis=-1)
    out = jnp.einsum("bhcd,bhdn->bhcn", attn, vh)
    out = out.reshape(b, c, h, w)
    return jnp.einsum("oc,bchw->bohw", params["wproj"], out)


# ----------------------------------------------------------------------------
# Parameter construction + driver
# ----------------------------------------------------------------------------

def make_params(key, dim, num_heads, kv_num_heads):
    rep = num_heads // kv_num_heads
    ckv = 2 * dim // rep
    ks = jax.random.split(key, 6)
    scale = 0.1
    return {
        "ln_w": jnp.ones((dim,), jnp.float32),
        "ln_b": jnp.zeros((dim,), jnp.float32),
        "wq": scale * jax.random.normal(ks[0], (dim, dim), jnp.float32),
        "wq_dw": scale * jax.random.normal(ks[1], (dim, 3, 3), jnp.float32),
        "wkv": scale * jax.random.normal(ks[2], (ckv, dim), jnp.float32),
        "wkv_dw": scale * jax.random.normal(ks[3], (ckv, 3, 3), jnp.float32),
        "wproj": scale * jax.random.normal(ks[4], (dim, dim), jnp.float32),
        "temperature": jnp.linspace(0.5, 1.5, num_heads).astype(jnp.float32),
    }


if __name__ == "__main__":
    B, DIM, H, W = 2, 32, 16, 16
    NUM_HEADS, KV_NUM_HEADS = 4, 2

    key = jax.random.PRNGKey(0)
    kx, kp = jax.random.split(key)
    x = jax.random.normal(kx, (B, DIM, H, W), jnp.float32)
    params = make_params(kp, DIM, NUM_HEADS, KV_NUM_HEADS)

    out = jax.jit(
        functools.partial(sgqa_forward, num_heads=NUM_HEADS, kv_num_heads=KV_NUM_HEADS)
    )(x, params)
    out = jax.block_until_ready(out)

    ref = sgqa_reference(x, params, NUM_HEADS, KV_NUM_HEADS)
    assert out.shape == (B, DIM, H, W)
    assert jnp.allclose(out, ref, atol=1e-4, rtol=1e-4), (
        float(jnp.max(jnp.abs(out - ref))))

    print("KERNEL_OK")
</pallas_src>

<mosaic_0001>
module attributes {stable_mosaic.version = 11 : i64} {
  func.func @_sgqa_fused_kernel(%arg0: i32, %arg1: memref<1x32x256xf32, #tpu.memory_space<vmem>>, %arg2: memref<32x1xf32, #tpu.memory_space<vmem>>, %arg3: memref<32x1xf32, #tpu.memory_space<vmem>>, %arg4: memref<64x288xf32, #tpu.memory_space<vmem>>, %arg5: memref<9x1x256xf32, #tpu.memory_space<vmem>>, %arg6: memref<32x1xf32, #tpu.memory_space<vmem>>, %arg7: memref<32x16xf32, #tpu.memory_space<vmem>>, %arg8: memref<32x32xf32, #tpu.memory_space<vmem>>, %arg9: memref<1x32x256xf32, #tpu.memory_space<vmem>>, %arg10: memref<288x256xf32, #tpu.memory_space<vmem>>) attributes {dimension_semantics = [#tpu.dimension_semantics<parallel>], iteration_bounds = array<i64: 2>, scalar_prefetch = 0 : i64, scratch_operands = 1 : i64, tpu.core_type = #tpu.core_type<tc>, window_params = [{transform_indices = @transform_0, window_bounds = array<i64: 1, 32, 256>}, {pipeline_mode = #tpu.pipeline_mode<synchronous>, transform_indices = @transform_1, window_bounds = array<i64: 32, 1>}, {pipeline_mode = #tpu.pipeline_mode<synchronous>, transform_indices = @transform_2, window_bounds = array<i64: 32, 1>}, {pipeline_mode = #tpu.pipeline_mode<synchronous>, transform_indices = @transform_3, window_bounds = array<i64: 64, 288>}, {pipeline_mode = #tpu.pipeline_mode<synchronous>, transform_indices = @transform_4, window_bounds = array<i64: 9, 1, 256>}, {pipeline_mode = #tpu.pipeline_mode<synchronous>, transform_indices = @transform_5, window_bounds = array<i64: 32, 1>}, {pipeline_mode = #tpu.pipeline_mode<synchronous>, transform_indices = @transform_6, window_bounds = array<i64: 32, 16>}, {pipeline_mode = #tpu.pipeline_mode<synchronous>, transform_indices = @transform_7, window_bounds = array<i64: 32, 32>}, {transform_indices = @transform_8, window_bounds = array<i64: 1, 32, 256>}]} {
    %c0 = arith.constant 0 : index
    %c0_0 = arith.constant 0 : index
    %c0_1 = arith.constant 0 : index
    %0 = vector.load %arg1[%c0, %c0_0, %c0_1] : memref<1x32x256xf32, #tpu.memory_space<vmem>>, vector<1x32x256xf32>
    %1 = vector.shape_cast %0 : vector<1x32x256xf32> to vector<32x256xf32>
    %cst = arith.constant dense<0.000000e+00> : vector<256xf32>
    %2 = vector.multi_reduction <add>, %1, %cst [0] : vector<32x256xf32> to vector<256xf32>
    %3 = vector.shape_cast %2 : vector<256xf32> to vector<1x256xf32>
    %cst_2 = arith.constant 3.200000e+01 : f32
    %4 = vector.broadcast %cst_2 : f32 to vector<1x256xf32>
    %5 = arith.divf %3, %4 : vector<1x256xf32>
    %6 = vector.broadcast %5 : vector<1x256xf32> to vector<32x256xf32>
    %7 = arith.subf %1, %6 : vector<32x256xf32>
    %8 = arith.mulf %7, %7 : vector<32x256xf32>
    %cst_3 = arith.constant dense<0.000000e+00> : vector<256xf32>
    %9 = vector.multi_reduction <add>, %8, %cst_3 [0] : vector<32x256xf32> to vector<256xf32>
    %10 = vector.shape_cast %9 : vector<256xf32> to vector<1x256xf32>
    %cst_4 = arith.constant 3.200000e+01 : f32
    %11 = vector.broadcast %cst_4 : f32 to vector<1x256xf32>
    %12 = arith.divf %10, %11 : vector<1x256xf32>
    %cst_5 = arith.constant 9.99999974E-6 : f32
    %13 = vector.broadcast %cst_5 : f32 to vector<1x256xf32>
    %14 = arith.addf %12, %13 : vector<1x256xf32>
    %15 = math.rsqrt %14 : vector<1x256xf32>
    %16 = vector.broadcast %15 : vector<1x256xf32> to vector<32x256xf32>
    %17 = arith.mulf %7, %16 : vector<32x256xf32>
    %c0_6 = arith.constant 0 : index
    %c0_7 = arith.constant 0 : index
    %18 = vector.load %arg2[%c0_6, %c0_7] : memref<32x1xf32, #tpu.memory_space<vmem>>, vector<32x1xf32>
    %19 = vector.broadcast %18 : vector<32x1xf32> to vector<32x256xf32>
    %20 = arith.mulf %17, %19 : vector<32x256xf32>
    %c0_8 = arith.constant 0 : index
    %c0_9 = arith.constant 0 : index
    %21 = vector.load %arg3[%c0_8, %c0_9] : memref<32x1xf32, #tpu.memory_space<vmem>>, vector<32x1xf32>
    %22 = vector.broadcast %21 : vector<32x1xf32> to vector<32x256xf32>
    %23 = arith.addf %20, %22 : vector<32x256xf32>
    %c17_i32 = arith.constant 17 : i32
    %24 = tpu.dynamic_rotate %23 by %c17_i32 dim 1 : vector<32x256xf32>, i32 -> vector<32x256xf32>
    %c0_10 = arith.constant 0 : index
    %c0_11 = arith.constant 0 : index
    %c0_12 = arith.constant 0 : index
    %25 = vector.load %arg5[%c0_10, %c0_11, %c0_12] : memref<9x1x256xf32, #tpu.memory_space<vmem>>, vector<1x1x256xf32>
    %26 = vector.shape_cast %25 : vector<1x1x256xf32> to vector<1x256xf32>
    %27 = vector.broadcast %26 : vector<1x256xf32> to vector<32x256xf32>
    %28 = arith.mulf %24, %27 : vector<32x256xf32>
    %c0_13 = arith.constant 0 : index
    %c0_14 = arith.constant 0 : index
    %29 = vector.load %arg10[%c0_13, %c0_14] : memref<288x256xf32, #tpu.memory_space<vmem>>, vector<32x256xf32>
    tpu.vector_store %arg10[%c0_13, %c0_14], %28 {strides = array<i32>} : memref<288x256xf32, #tpu.memory_space<vmem>>, vector<32x256xf32>,
    %c16_i32 = arith.constant 16 : i32
    %30 = tpu.dynamic_rotate %23 by %c16_i32 dim 1 : vector<32x256xf32>, i32 -> vector<32x256xf32>
    %c1 = arith.constant 1 : index
    %c0_15 = arith.constant 0 : index
    %c0_16 = arith.constant 0 : index
    %31 = vector.load %arg5[%c1, %c0_15, %c0_16] : memref<9x1x256xf32, #tpu.memory_space<vmem>>, vector<1x1x256xf32>
    %32 = vector.shape_cast %31 : vector<1x1x256xf32> to vector<1x256xf32>
    %33 = vector.broadcast %32 : vector<1x256xf32> to vector<32x256xf32>
    %34 = arith.mulf %30, %33 : vector<32x256xf32>
    %c32 = arith.constant 32 : index
    %c0_17 = arith.constant 0 : index
    %35 = vector.load %arg10[%c32, %c0_17] : memref<288x256xf32, #tpu.memory_space<vmem>>, vector<32x256xf32>
    tpu.vector_store %arg10[%c32, %c0_17], %34 {strides = array<i32>} : memref<288x256xf32, #tpu.memory_space<vmem>>, vector<32x256xf32>,
    %c15_i32 = arith.constant 15 : i32
    %36 = tpu.dynamic_rotate %23 by %c15_i32 dim 1 : vector<32x256xf32>, i32 -> vector<32x256xf32>
    %c2 = arith.constant 2 : index
    %c0_18 = arith.constant 0 : index
    %c0_19 = arith.constant 0 : index
    %37 = vector.load %arg5[%c2, %c0_18, %c0_19] : memref<9x1x256xf32, #tpu.memory_space<vmem>>, vector<1x1x256xf32>
    %38 = vector.shape_cast %37 : vector<1x1x256xf32> to vector<1x256xf32>
    %39 = vector.broadcast %38 : vector<1x256xf32> to vector<32x256xf32>
    %40 = arith.mulf %36, %39 : vector<32x256xf32>
    %c64 = arith.constant 64 : index
    %c0_20 = arith.constant 0 : index
    %41 = vector.load %arg10[%c64, %c0_20] : memref<288x256xf32, #tpu.memory_space<vmem>>, vector<32x256xf32>
    tpu.vector_store %arg10[%c64, %c0_20], %40 {strides = array<i32>} : memref<288x256xf32, #tpu.memory_space<vmem>>, vector<32x256xf32>,
    %c1_i32 = arith.constant 1 : i32
    %42 = tpu.dynamic_rotate %23 by %c1_i32 dim 1 : vector<32x256xf32>, i32 -> vector<32x256xf32>
    %c3 = arith.constant 3 : index
    %c0_21 = arith.constant 0 : index
    %c0_22 = arith.constant 0 : index
    %43 = vector.load %arg5[%c3, %c0_21, %c0_22] : memref<9x1x256xf32, #tpu.memory_space<vmem>>, vector<1x1x256xf32>
    %44 = vector.shape_cast %43 : vector<1x1x256xf32> to vector<1x256xf32>
    %45 = vector.broadcast %44 : vector<1x256xf32> to vector<32x256xf32>
    %46 = arith.mulf %42, %45 : vector<32x256xf32>
    %c96 = arith.constant 96 : index
    %c0_23 = arith.constant 0 : index
    %47 = vector.load %arg10[%c96, %c0_23] : memref<288x256xf32, #tpu.memory_space<vmem>>, vector<32x256xf32>
    tpu.vector_store %arg10[%c96, %c0_23], %46 {strides = array<i32>} : memref<288x256xf32, #tpu.memory_space<vmem>>, vector<32x256xf32>,
    %c128 = arith.constant 128 : index
    %c0_24 = arith.constant 0 : index
    %48 = vector.load %arg10[%c128, %c0_24] : memref<288x256xf32, #tpu.memory_space<vmem>>, vector<32x256xf32>
    tpu.vector_store %arg10[%c128, %c0_24], %23 {strides = array<i32>} : memref<288x256xf32, #tpu.memory_space<vmem>>, vector<32x256xf32>,
    %c255_i32 = arith.constant 255 : i32
    %49 = tpu.dynamic_rotate %23 by %c255_i32 dim 1 : vector<32x256xf32>, i32 -> vector<32x256xf32>
    %c5 = arith.constant 5 : index
    %c0_25 = arith.constant 0 : index
    %c0_26 = arith.constant 0 : index
    %50 = vector.load %arg5[%c5, %c0_25, %c0_26] : memref<9x1x256xf32, #tpu.memory_space<vmem>>, vector<1x1x256xf32>
    %51 = vector.shape_cast %50 : vector<1x1x256xf32> to vector<1x256xf32>
    %52 = vector.broadcast %51 : vector<1x256xf32> to vector<32x256xf32>
    %53 = arith.mulf %49, %52 : vector<32x256xf32>
    %c160 = arith.constant 160 : index
    %c0_27 = arith.constant 0 : index
    %54 = vector.load %arg10[%c160, %c0_27] : memref<288x256xf32, #tpu.memory_space<vmem>>, vector<32x256xf32>
    tpu.vector_store %arg10[%c160, %c0_27], %53 {strides = array<i32>} : memref<288x256xf32, #tpu.memory_space<vmem>>, vector<32x256xf32>,
    %c241_i32 = arith.constant 241 : i32
    %55 = tpu.dynamic_rotate %23 by %c241_i32 dim 1 : vector<32x256xf32>, i32 -> vector<32x256xf32>
    %c6 = arith.constant 6 : index
    %c0_28 = arith.constant 0 : index
    %c0_29 = arith.constant 0 : index
    %56 = vector.load %arg5[%c6, %c0_28, %c0_29] : memref<9x1x256xf32, #tpu.memory_space<vmem>>, vector<1x1x256xf32>
    %57 = vector.shape_cast %56 : vector<1x1x256xf32> to vector<1x256xf32>
    %58 = vector.broadcast %57 : vector<1x256xf32> to vector<32x256xf32>
    %59 = arith.mulf %55, %58 : vector<32x256xf32>
    %c192 = arith.constant 192 : index
    %c0_30 = arith.constant 0 : index
    %60 = vector.load %arg10[%c192, %c0_30] : memref<288x256xf32, #tpu.memory_space<vmem>>, vector<32x256xf32>
    tpu.vector_store %arg10[%c192, %c0_30], %59 {strides = array<i32>} : memref<288x256xf32, #tpu.memory_space<vmem>>, vector<32x256xf32>,
    %c240_i32 = arith.constant 240 : i32
    %61 = tpu.dynamic_rotate %23 by %c240_i32 dim 1 : vector<32x256xf32>, i32 -> vector<32x256xf32>
    %c7 = arith.constant 7 : index
    %c0_31 = arith.constant 0 : index
    %c0_32 = arith.constant 0 : index
    %62 = vector.load %arg5[%c7, %c0_31, %c0_32] : memref<9x1x256xf32, #tpu.memory_space<vmem>>, vector<1x1x256xf32>
    %63 = vector.shape_cast %62 : vector<1x1x256xf32> to vector<1x256xf32>
    %64 = vector.broadcast %63 : vector<1x256xf32> to vector<32x256xf32>
    %65 = arith.mulf %61, %64 : vector<32x256xf32>
    %c224 = arith.constant 224 : index
    %c0_33 = arith.constant 0 : index
    %66 = vector.load %arg10[%c224, %c0_33] : memref<288x256xf32, #tpu.memory_space<vmem>>, vector<32x256xf32>
    tpu.vector_store %arg10[%c224, %c0_33], %65 {strides = array<i32>} : memref<288x256xf32, #tpu.memory_space<vmem>>, vector<32x256xf32>,
    %c239_i32 = arith.constant 239 : i32
    %67 = tpu.dynamic_rotate %23 by %c239_i32 dim 1 : vector<32x256xf32>, i32 -> vector<32x256xf32>
    %c8 = arith.constant 8 : index
    %c0_34 = arith.constant 0 : index
    %c0_35 = arith.constant 0 : index
    %68 = vector.load %arg5[%c8, %c0_34, %c0_35] : memref<9x1x256xf32, #tpu.memory_space<vmem>>, vector<1x1x256xf32>
    %69 = vector.shape_cast %68 : vector<1x1x256xf32> to vector<1x256xf32>
    %70 = vector.broadcast %69 : vector<1x256xf32> to vector<32x256xf32>
    %71 = arith.mulf %67, %70 : vector<32x256xf32>
    %c256 = arith.constant 256 : index
    %c0_36 = arith.constant 0 : index
    %72 = vector.load %arg10[%c256, %c0_36] : memref<288x256xf32, #tpu.memory_space<vmem>>, vector<32x256xf32>
    tpu.vector_store %arg10[%c256, %c0_36], %71 {strides = array<i32>} : memref<288x256xf32, #tpu.memory_space<vmem>>, vector<32x256xf32>,
    %c0_37 = arith.constant 0 : index
    %c0_38 = arith.constant 0 : index
    %73 = vector.load %arg4[%c0_37, %c0_38] : memref<64x288xf32, #tpu.memory_space<vmem>>, vector<64x288xf32>
    %c0_39 = arith.constant 0 : index
    %c0_40 = arith.constant 0 : index
    %74 = vector.load %arg10[%c0_39, %c0_40] : memref<288x256xf32, #tpu.memory_space<vmem>>, vector<288x256xf32>
    %cst_41 = arith.constant dense<0.000000e+00> : vector<64x256xf32>
    %75 = tpu.matmul %73, %74, %cst_41 {dimension_numbers = #tpu.dot_dimension_numbers<[1], [0], [0], [1], [0, 0, 1, 1], [], []>} : vector<64x288xf32>, vector<288x256xf32>, vector<64x256xf32> -> vector<64x256xf32>
    %76 = vector.extract_strided_slice %75 {offsets = [0, 0], sizes = [32, 256], strides = [1, 1]} : vector<64x256xf32> to vector<32x256xf32>
    %77 = vector.extract_strided_slice %75 {offsets = [32, 0], sizes = [16, 256], strides = [1, 1]} : vector<64x256xf32> to vector<16x256xf32>
    %78 = vector.extract_strided_slice %75 {offsets = [48, 0], sizes = [16, 256], strides = [1, 1]} : vector<64x256xf32> to vector<16x256xf32>
    %cst_42 = arith.constant dense<0.000000e+00> : vector<32x16xf32>
    %79 = tpu.matmul %76, %77, %cst_42 {dimension_numbers = #tpu.dot_dimension_numbers<[1], [1], [0], [0], [0, 0, 1, 0], [], []>} : vector<32x256xf32>, vector<16x256xf32>, vector<32x16xf32> -> vector<32x16xf32>
    %80 = arith.mulf %76, %76 : vector<32x256xf32>
    %cst_43 = arith.constant dense<0.000000e+00> : vector<32xf32>
    %81 = vector.multi_reduction <add>, %80, %cst_43 [1] : vector<32x256xf32> to vector<32xf32>
    %82 = vector.shape_cast %81 : vector<32xf32> to vector<32x1xf32>
    %83 = math.sqrt %82 : vector<32x1xf32>
    %cst_44 = arith.constant 9.99999996E-13 : f32
    %84 = vector.broadcast %cst_44 : f32 to vector<32x1xf32>
    %85 = arith.maximumf %83, %84 : vector<32x1xf32>
    %cst_45 = arith.constant 1.000000e+00 : f32
    %86 = vector.broadcast %cst_45 : f32 to vector<32x1xf32>
    %87 = arith.divf %86, %85 : vector<32x1xf32>
    %88 = arith.mulf %77, %77 : vector<16x256xf32>
    %cst_46 = arith.constant 1.000000e+00 : f32
    %89 = vector.broadcast %cst_46 : f32 to vector<1x256xf32>
    %cst_47 = arith.constant dense<0.000000e+00> : vector<1x16xf32>
    %90 = tpu.matmul %89, %88, %cst_47 {dimension_numbers = #tpu.dot_dimension_numbers<[1], [1], [0], [0], [0, 0, 1, 0], [], []>} : vector<1x256xf32>, vector<16x256xf32>, vector<1x16xf32> -> vector<1x16xf32>
    %91 = math.sqrt %90 : vector<1x16xf32>
    %cst_48 = arith.constant 9.99999996E-13 : f32
    %92 = vector.broadcast %cst_48 : f32 to vector<1x16xf32>
    %93 = arith.maximumf %91, %92 : vector<1x16xf32>
    %cst_49 = arith.constant 1.000000e+00 : f32
    %94 = vector.broadcast %cst_49 : f32 to vector<1x16xf32>
    %95 = arith.divf %94, %93 : vector<1x16xf32>
    %c0_50 = arith.constant 0 : index
    %c0_51 = arith.constant 0 : index
    %96 = vector.load %arg6[%c0_50, %c0_51] : memref<32x1xf32, #tpu.memory_space<vmem>>, vector<32x1xf32>
    %97 = arith.mulf %87, %96 : vector<32x1xf32>
    %98 = vector.broadcast %97 : vector<32x1xf32> to vector<32x16xf32>
    %99 = arith.mulf %79, %98 : vector<32x16xf32>
    %100 = vector.broadcast %95 : vector<1x16xf32> to vector<32x16xf32>
    %101 = arith.mulf %99, %100 : vector<32x16xf32>
    %c0_52 = arith.constant 0 : index
    %c0_53 = arith.constant 0 : index
    %102 = vector.load %arg7[%c0_52, %c0_53] : memref<32x16xf32, #tpu.memory_space<vmem>>, vector<32x16xf32>
    %103 = arith.addf %101, %102 : vector<32x16xf32>
    %cst_54 = arith.constant dense<0xFF800000> : vector<32xf32>
    %104 = vector.multi_reduction <maximumf>, %103, %cst_54 [1] : vector<32x16xf32> to vector<32xf32>
    %105 = vector.shape_cast %104 : vector<32xf32> to vector<32x1xf32>
    %106 = vector.broadcast %105 : vector<32x1xf32> to vector<32x16xf32>
    %107 = arith.subf %103, %106 : vector<32x16xf32>
    %108 = math.exp %107 : vector<32x16xf32>
    %cst_55 = arith.constant dense<0.000000e+00> : vector<32xf32>
    %109 = vector.multi_reduction <add>, %108, %cst_55 [1] : vector<32x16xf32> to vector<32xf32>
    %110 = vector.shape_cast %109 : vector<32xf32> to vector<32x1xf32>
    %cst_56 = arith.constant 1.000000e+00 : f32
    %111 = vector.broadcast %cst_56 : f32 to vector<32x1xf32>
    %112 = arith.divf %111, %110 : vector<32x1xf32>
    %113 = vector.broadcast %112 : vector<32x1xf32> to vector<32x16xf32>
    %114 = arith.mulf %108, %113 : vector<32x16xf32>
    %cst_57 = arith.constant dense<0.000000e+00> : vector<32x256xf32>
    %115 = tpu.matmul %114, %78, %cst_57 {dimension_numbers = #tpu.dot_dimension_numbers<[1], [0], [0], [1], [0, 0, 1, 1], [], []>} : vector<32x16xf32>, vector<16x256xf32>, vector<32x256xf32> -> vector<32x256xf32>
    %c0_58 = arith.constant 0 : index
    %c0_59 = arith.constant 0 : index
    %116 = vector.load %arg8[%c0_58, %c0_59] : memref<32x32xf32, #tpu.memory_space<vmem>>, vector<32x32xf32>
    %cst_60 = arith.constant dense<0.000000e+00> : vector<32x256xf32>
    %117 = tpu.matmul %116, %115, %cst_60 {dimension_numbers = #tpu.dot_dimension_numbers<[1], [0], [0], [1], [0, 0, 1, 1], [], []>} : vector<32x32xf32>, vector<32x256xf32>, vector<32x256xf32> -> vector<32x256xf32>
    %c0_61 = arith.constant 0 : index
    %c0_62 = arith.constant 0 : index
    %c0_63 = arith.constant 0 : index
    %118 = vector.load %arg9[%c0_61, %c0_62, %c0_63] : memref<1x32x256xf32, #tpu.memory_space<vmem>>, vector<1x32x256xf32>
    %119 = vector.shape_cast %118 : vector<1x32x256xf32> to vector<32x256xf32>
    %120 = vector.shape_cast %117 : vector<32x256xf32> to vector<1x32x256xf32>
    tpu.vector_store %arg9[%c0_61, %c0_62, %c0_63], %120 {strides = array<i32>} : memref<1x32x256xf32, #tpu.memory_space<vmem>>, vector<1x32x256xf32>,
    return
  }
  func.func @transform_0(%arg0: i32) -> (i32, i32, i32) {
    %c0_i32 = arith.constant 0 : i32
    %c0_i32_0 = arith.constant 0 : i32
    %c0_i32_1 = arith.constant 0 : i32
    return %arg0, %c0_i32, %c0_i32_0 : i32, i32, i32
  }
  func.func @transform_1(%arg0: i32) -> (i32, i32) {
    %c0_i32 = arith.constant 0 : i32
    %c0_i32_0 = arith.constant 0 : i32
    %c0_i32_1 = arith.constant 0 : i32
    return %c0_i32, %c0_i32_0 : i32, i32
  }
  func.func @transform_2(%arg0: i32) -> (i32, i32) {
    %c0_i32 = arith.constant 0 : i32
    %c0_i32_0 = arith.constant 0 : i32
    %c0_i32_1 = arith.constant 0 : i32
    return %c0_i32, %c0_i32_0 : i32, i32
  }
  func.func @transform_3(%arg0: i32) -> (i32, i32) {
    %c0_i32 = arith.constant 0 : i32
    %c0_i32_0 = arith.constant 0 : i32
    %c0_i32_1 = arith.constant 0 : i32
    return %c0_i32, %c0_i32_0 : i32, i32
  }
  func.func @transform_4(%arg0: i32) -> (i32, i32, i32) {
    %c0_i32 = arith.constant 0 : i32
    %c0_i32_0 = arith.constant 0 : i32
    %c0_i32_1 = arith.constant 0 : i32
    %c0_i32_2 = arith.constant 0 : i32
    return %c0_i32, %c0_i32_0, %c0_i32_1 : i32, i32, i32
  }
  func.func @transform_5(%arg0: i32) -> (i32, i32) {
    %c0_i32 = arith.constant 0 : i32
    %c0_i32_0 = arith.constant 0 : i32
    %c0_i32_1 = arith.constant 0 : i32
    return %c0_i32, %c0_i32_0 : i32, i32
  }
  func.func @transform_6(%arg0: i32) -> (i32, i32) {
    %c0_i32 = arith.constant 0 : i32
    %c0_i32_0 = arith.constant 0 : i32
    %c0_i32_1 = arith.constant 0 : i32
    return %c0_i32, %c0_i32_0 : i32, i32
  }
  func.func @transform_7(%arg0: i32) -> (i32, i32) {
    %c0_i32 = arith.constant 0 : i32
    %c0_i32_0 = arith.constant 0 : i32
    %c0_i32_1 = arith.constant 0 : i32
    return %c0_i32, %c0_i32_0 : i32, i32
  }
  func.func @transform_8(%arg0: i32) -> (i32, i32, i32) {
    %c0_i32 = arith.constant 0 : i32
    %c0_i32_0 = arith.constant 0 : i32
    %c0_i32_1 = arith.constant 0 : i32
    return %arg0, %c0_i32, %c0_i32_0 : i32, i32, i32
  }
}

</mosaic_0001>

<llo_original>
// kernel: mul.8
$region0: #{mul.8}
  %s0 = inlined_call_operand.vmem [shape: f32[64,3,3], index: 0, kind: input, shape index: {}]
  %s1 = inlined_call_operand.vmem [shape: f32[64,9], index: 1, kind: output, shape index: {}]
  $region1: #{mul.8} parent=0
    #allocation0 [shape = 'u8[12288]{0}', space=vmem, size = 0x3000, scoped, tag = 'scoped mem for input reshape']
    %s3 = sshllo.u32 0, 4
    %s4 = smul.addr 4, 2
    %s5 = scalar_lea.vmem %s0, %s4
    %v6 = vld [vmem:[%s5] sm:%s3]
    %s7 = scalar_lea.vmem [#allocation0], 16
    %8 = vst [vmem:[%s7] sm:%s3] %v6
    %s9 = scalar_lea.vmem %s0, 4
    %v10 = vld [vmem:[%s9] sm:%s3]
    %s11 = scalar_lea.vmem [#allocation0], 8
    %12 = vst [vmem:[%s11] sm:%s3] %v10
    %v13 = vld [vmem:[%s0] sm:%s3]
    %14 = vst [vmem:[#allocation0] sm:%s3] %v13
    %v15 = vld [vmem:[#allocation0] sm:$0x7]
    %vm16 = vcmask 523264
    %17 = vst.msk [vmem:[%s1] sm:$0x7] %vm16, %v15
    %s18 = scalar_lea.vmem [#allocation0], 8
    %v19 = vld [vmem:[%s18] sm:$0x7]
    %vm20 = vcmask 523264
    %s21 = scalar_lea.vmem %s1, 3
    %22 = vst.msk [vmem:[%s21] sm:$0x7] %vm20, %v19
    %s23 = scalar_lea.vmem [#allocation0], 16
    %v24 = vld [vmem:[%s23] sm:$0x7]
    %vm25 = vcmask 523264
    %s26 = scalar_lea.vmem %s1, 6
    %27 = vst.msk [vmem:[%s26] sm:$0x7] %vm25, %v24

// kernel: sgqa_forward.1
$region0: #{sgqa_forward.1}
  #allocation0 [shape = 'u32[]', space=smem, size = 0x4, offset = 0x4, fixed_abs, tag = 'smem constant byte address 0x4 - core index']
  #allocation1 [shape = 'u32[144,128]{1,0:T(1,128)}', space=vmem, size = 0x12000, scoped, tag = 'internal scratch']
  #allocation2 [shape = 'f32[288,256]{1,0:T(8,128)}', space=vmem, size = 0x48000, scoped, tag = 'scratch operand']
  %s0 = inlined_call_operand.hbm [shape: f32[2,32,256], index: 0, kind: input, shape index: {}]
  %s1 = inlined_call_operand.hbm [shape: f32[32,1], index: 1, kind: input, shape index: {}]
  %s2 = inlined_call_operand.hbm [shape: f32[32,1], index: 2, kind: input, shape index: {}]
  %s3 = inlined_call_operand.hbm [shape: f32[64,288], index: 3, kind: input, shape index: {}]
  %s4 = inlined_call_operand.hbm [shape: f32[9,1,256], index: 4, kind: input, shape index: {}]
  %s5 = inlined_call_operand.hbm [shape: f32[32,1], index: 5, kind: input, shape index: {}]
  %s6 = inlined_call_operand.hbm [shape: f32[32,16], index: 6, kind: input, shape index: {}]
  %s7 = inlined_call_operand.hbm [shape: f32[32,32], index: 7, kind: input, shape index: {}]
  %s8 = inlined_call_operand.hbm [shape: f32[2,32,256], index: 8, kind: output, shape index: {}]
  %s9 = sld [smem:[#allocation0]]
  $region97: #{sgqa_forward.1} parent=0
    _
  %s11 = ssub.s32 1, %s9
  %s12 = scalar_select 0, %s11, %s9
  $region1: #{sgqa_forward.1} parent=0
    #allocation3 [shape = 'u8[65536]{0}', space=vmem, size = 0x10000, scoped, tag = 'input window, operand 0']
    #allocation4 [shape = 's32[2]{0}', space=sflag, size = 0x8, scoped, tag = 'scoped memory for sgqa_forward.1']
    #allocation5 [shape = 's32[2]{0}', space=sflag, size = 0x8, scoped, tag = 'scoped memory for sgqa_forward.1']
    #allocation6 [shape = 'u8[16384]{0}', space=vmem, size = 0x4000, scoped, tag = 'input window, operand 1, single buffered']
    #allocation7 [shape = 's32[1]{0}', space=sflag, size = 0x4, scoped, tag = 'scoped memory for sgqa_forward.1']
    #allocation8 [shape = 'u8[16384]{0}', space=vmem, size = 0x4000, scoped, tag = 'input window, operand 2, single buffered']
    #allocation9 [shape = 'u8[98304]{0}', space=vmem, size = 0x18000, scoped, tag = 'input window, operand 3, single buffered']
    #allocation10 [shape = 's32[1]{0}', space=sflag, size = 0x4, scoped, tag = 'scoped memory for sgqa_forward.1']
    #allocation11 [shape = 'u8[9216]{0}', space=vmem, size = 0x2400, scoped, tag = 'input window, operand 4, single buffered']
    #allocation12 [shape = 'u8[16384]{0}', space=vmem, size = 0x4000, scoped, tag = 'input window, operand 5, single buffered']
    #allocation13 [shape = 's32[1]{0}', space=sflag, size = 0x4, scoped, tag = 'scoped memory for sgqa_forward.1']
    #allocation14 [shape = 'u8[16384]{0}', space=vmem, size = 0x4000, scoped, tag = 'input window, operand 6, single buffered']
    #allocation15 [shape = 'u8[16384]{0}', space=vmem, size = 0x4000, scoped, tag = 'input window, operand 7, single buffered']
    #allocation16 [shape = 's32[1]{0}', space=sflag, size = 0x4, scoped, tag = 'scoped memory for sgqa_forward.1']
    #allocation17 [shape = 'u8[65536]{0}', space=vmem, size = 0x10000, scoped, tag = 'output window, operand 0']
    %13 = vsyncpa [#allocation4], 0
    %s14 = scalar_lea.sflag [#allocation4], 1
    %15 = vsyncpa %s14, 0
    %16 = vsyncpa [#allocation7], 0
    %17 = vsyncpa [#allocation10], 0
    %18 = vsyncpa [#allocation13], 0
    %19 = vsyncpa [#allocation16], 0
    %20 = vsyncpa [#allocation5], 0
    %s21 = scalar_lea.sflag [#allocation5], 1
    %22 = vsyncpa %s21, 0
    loop: start=0, step=1, limit=4
    $region2: #{sgqa_forward.1} parent=1 // loop_pre_header
      _
    $region3: #{sgqa_forward.1} parent=1 // loop_header
      %s24 = sphi 0, %s28
      %p25 = scmp.ge.s32.totalorder %s24, 4
      %s34 = sphi 0, %s36
      %s37 = sphi 0, %s34
      %s38 = sphi 0, %s37
      %s54 = sphi 0, %s38
      %s58 = sphi 0, %s58
      %s60 = sphi 0, %s58
      %s61 = sphi 0, %s60
      %s75 = sphi 0, %s61
      %s79 = sphi 0, %s79
      %s81 = sphi 0, %s79
      %s82 = sphi 0, %s81
      %s96 = sphi 0, %s82
      %s100 = sphi 0, %s100
      %s102 = sphi 0, %s100
      %s103 = sphi 0, %s102
      %s117 = sphi 0, %s103
      %s121 = sphi 0, %s121
      %s123 = sphi 0, %s121
      %s124 = sphi 0, %s123
      %s138 = sphi 0, %s124
      %s142 = sphi 0, %s142
      %s144 = sphi 0, %s142
      %s145 = sphi 0, %s144
      %s159 = sphi 0, %s145
      %s163 = sphi 0, %s163
      %s165 = sphi 0, %s163
      %s166 = sphi 0, %s165
      %s180 = sphi 0, %s166
      %s184 = sphi 0, %s184
      %s186 = sphi 0, %s184
      %s187 = sphi 0, %s186
      %s201 = sphi 0, %s187
      %s207 = sphi 0, %s209
      %s210 = sphi 0, %s207
      %s211 = sphi 0, %s210
      %s227 = sphi 0, %s211
    $region4: #{sgqa_forward.1} parent=1 // loop_header_branch
      %27 = sbr.rel (%p25) target = $region8
    $region5: #{sgqa_forward.1} parent=1 // loop_body
      %s29 = ssub.s32 %s24, 1
      %s30 = ssub.s32 %s24, 2
      %s31 = sadd.s32 %s24, 1
      %s32 = ssub.s32 %s24, %s31
      %p33 = scmp.eq.s32.totalorder %s32, 0
      %s35 = sadd.s32 %s34, 1
      %s36 = scalar_select %p33, %s34, %s35
      %p39 = pneg %p33
      %p40 = scmp.eq.s32.totalorder %s24, 1
      %p41 = por %p39, %p40
      %p42 = scmp.ne.s32.totalorder %s34, %s37
      %p43 = scmp.eq.s32.totalorder %s24, 0
      %p44 = por %p42, %p43
      %p45 = scmp.ne.s32.totalorder %s34, %s37
      %p46 = scmp.eq.s32.totalorder %s29, 1
      %p47 = por %p45, %p46
      %p48 = scmp.ne.s32.totalorder %s37, %s38
      %p49 = scmp.eq.s32.totalorder %s29, 0
      %p50 = por %p48, %p49
      %p51 = scmp.ne.s32.totalorder %s37, %s38
      %p52 = scmp.eq.s32.totalorder %s30, 1
      %p53 = por %p51, %p52
      %p55 = scmp.ne.s32.totalorder %s38, %s54
      %p56 = scmp.eq.s32.totalorder %s30, 0
      %p57 = por %p55, %p56
      %s59 = sadd.s32 %s58, 1
      %p62 = scmp.eq.s32.totalorder %s24, 1
      %p63 = scmp.ne.s32.totalorder %s58, %s60
      %p64 = scmp.eq.s32.totalorder %s24, 0
      %p65 = por %p63, %p64
      %p66 = scmp.ne.s32.totalorder %s58, %s60
      %p67 = scmp.eq.s32.totalorder %s29, 1
      %p68 = por %p66, %p67
      %p69 = scmp.ne.s32.totalorder %s60, %s61
      %p70 = scmp.eq.s32.totalorder %s29, 0
      %p71 = por %p69, %p70
      %p72 = scmp.ne.s32.totalorder %s60, %s61
      %p73 = scmp.eq.s32.totalorder %s30, 1
      %p74 = por %p72, %p73
      %p76 = scmp.ne.s32.totalorder %s61, %s75
      %p77 = scmp.eq.s32.totalorder %s30, 0
      %p78 = por %p76, %p77
      %s80 = sadd.s32 %s79, 1
      %p83 = scmp.eq.s32.totalorder %s24, 1
      %p84 = scmp.ne.s32.totalorder %s79, %s81
      %p85 = scmp.eq.s32.totalorder %s24, 0
      %p86 = por %p84, %p85
      %p87 = scmp.ne.s32.totalorder %s79, %s81
      %p88 = scmp.eq.s32.totalorder %s29, 1
      %p89 = por %p87, %p88
      %p90 = scmp.ne.s32.totalorder %s81, %s82
      %p91 = scmp.eq.s32.totalorder %s29, 0
      %p92 = por %p90, %p91
      %p93 = scmp.ne.s32.totalorder %s81, %s82
      %p94 = scmp.eq.s32.totalorder %s30, 1
      %p95 = por %p93, %p94
      %p97 = scmp.ne.s32.totalorder %s82, %s96
      %p98 = scmp.eq.s32.totalorder %s30, 0
      %p99 = por %p97, %p98
      %s101 = sadd.s32 %s100, 1
      %p104 = scmp.eq.s32.totalorder %s24, 1
      %p105 = scmp.ne.s32.totalorder %s100, %s102
      %p106 = scmp.eq.s32.totalorder %s24, 0
      %p107 = por %p105, %p106
      %p108 = scmp.ne.s32.totalorder %s100, %s102
      %p109 = scmp.eq.s32.totalorder %s29, 1
      %p110 = por %p108, %p109
      %p111 = scmp.ne.s32.totalorder %s102, %s103
      %p112 = scmp.eq.s32.totalorder %s29, 0
      %p113 = por %p111, %p112
      %p114 = scmp.ne.s32.totalorder %s102, %s103
      %p115 = scmp.eq.s32.totalorder %s30, 1
      %p116 = por %p114, %p115
      %p118 = scmp.ne.s32.totalorder %s103, %s117
      %p119 = scmp.eq.s32.totalorder %s30, 0
      %p120 = por %p118, %p119
      %s122 = sadd.s32 %s121, 1
      %p125 = scmp.eq.s32.totalorder %s24, 1
      %p126 = scmp.ne.s32.totalorder %s121, %s123
      %p127 = scmp.eq.s32.totalorder %s24, 0
      %p128 = por %p126, %p127
      %p129 = scmp.ne.s32.totalorder %s121, %s123
      %p130 = scmp.eq.s32.totalorder %s29, 1
      %p131 = por %p129, %p130
      %p132 = scmp.ne.s32.totalorder %s123, %s124
      %p133 = scmp.eq.s32.totalorder %s29, 0
      %p134 = por %p132, %p133
      %p135 = scmp.ne.s32.totalorder %s123, %s124
      %p136 = scmp.eq.s32.totalorder %s30, 1
      %p137 = por %p135, %p136
      %p139 = scmp.ne.s32.totalorder %s124, %s138
      %p140 = scmp.eq.s32.totalorder %s30, 0
      %p141 = por %p139, %p140
      %s143 = sadd.s32 %s142, 1
      %p146 = scmp.eq.s32.totalorder %s24, 1
      %p147 = scmp.ne.s32.totalorder %s142, %s144
      %p148 = scmp.eq.s32.totalorder %s24, 0
      %p149 = por %p147, %p148
      %p150 = scmp.ne.s32.totalorder %s142, %s144
      %p151 = scmp.eq.s32.totalorder %s29, 1
      %p152 = por %p150, %p151
      %p153 = scmp.ne.s32.totalorder %s144, %s145
      %p154 = scmp.eq.s32.totalorder %s29, 0
      %p155 = por %p153, %p154
      %p156 = scmp.ne.s32.totalorder %s144, %s145
      %p157 = scmp.eq.s32.totalorder %s30, 1
      %p158 = por %p156, %p157
      %p160 = scmp.ne.s32.totalorder %s145, %s159
      %p161 = scmp.eq.s32.totalorder %s30, 0
      %p162 = por %p160, %p161
      %s164 = sadd.s32 %s163, 1
      %p167 = scmp.eq.s32.totalorder %s24, 1
      %p168 = scmp.ne.s32.totalorder %s163, %s165
      %p169 = scmp.eq.s32.totalorder %s24, 0
      %p170 = por %p168, %p169
      %p171 = scmp.ne.s32.totalorder %s163, %s165
      %p172 = scmp.eq.s32.totalorder %s29, 1
      %p173 = por %p171, %p172
      %p174 = scmp.ne.s32.totalorder %s165, %s166
      %p175 = scmp.eq.s32.totalorder %s29, 0
      %p176 = por %p174, %p175
      %p177 = scmp.ne.s32.totalorder %s165, %s166
      %p178 = scmp.eq.s32.totalorder %s30, 1
      %p179 = por %p177, %p178
      %p181 = scmp.ne.s32.totalorder %s166, %s180
      %p182 = scmp.eq.s32.totalorder %s30, 0
      %p183 = por %p181, %p182
      %s185 = sadd.s32 %s184, 1
      %p188 = scmp.eq.s32.totalorder %s24, 1
      %p189 = scmp.ne.s32.totalorder %s184, %s186
      %p190 = scmp.eq.s32.totalorder %s24, 0
      %p191 = por %p189, %p190
      %p192 = scmp.ne.s32.totalorder %s184, %s186
      %p193 = scmp.eq.s32.totalorder %s29, 1
      %p194 = por %p192, %p193
      %p195 = scmp.ne.s32.totalorder %s186, %s187
      %p196 = scmp.eq.s32.totalorder %s29, 0
      %p197 = por %p195, %p196
      %p198 = scmp.ne.s32.totalorder %s186, %s187
      %p199 = scmp.eq.s32.totalorder %s30, 1
      %p200 = por %p198, %p199
      %p202 = scmp.ne.s32.totalorder %s187, %s201
      %p203 = scmp.eq.s32.totalorder %s30, 0
      %p204 = por %p202, %p203
      %s205 = ssub.s32 %s24, %s31
      %p206 = scmp.eq.s32.totalorder %s205, 0
      %s208 = sadd.s32 %s207, 1
      %s209 = scalar_select %p206, %s207, %s208
      %p212 = pneg %p206
      %p213 = scmp.eq.s32.totalorder %s24, 1
      %p214 = por %p212, %p213
      %p215 = scmp.ne.s32.totalorder %s207, %s210
      %p216 = scmp.eq.s32.totalorder %s24, 0
      %p217 = por %p215, %p216
      %p218 = scmp.ne.s32.totalorder %s207, %s210
      %p219 = scmp.eq.s32.totalorder %s29, 1
      %p220 = por %p218, %p219
      %p221 = scmp.ne.s32.totalorder %s210, %s211
      %p222 = scmp.eq.s32.totalorder %s29, 0
      %p223 = por %p221, %p222
      %p224 = scmp.ne.s32.totalorder %s210, %s211
      %p225 = scmp.eq.s32.totalorder %s30, 1
      %p226 = por %p224, %p225
      %p228 = scmp.ne.s32.totalorder %s211, %s227
      %p229 = scmp.eq.s32.totalorder %s30, 0
      %p230 = por %p228, %p229
      %p231 = scmp.le.s32.totalorder 1, %s24
      %p232 = scmp.lt.s32.totalorder %s24, 3
      %p233 = pnand %p231, %p232
      %p234 = pneg %p233
      // Predicated region
      $region9: #{sgqa_forward.1} parent=5 // pred_check
        _
      $region10: #{sgqa_forward.1} parent=5 // pred_check_branch
        %236 = sbr.rel (%p233) target = $region12
      $region11: #{sgqa_forward.1} parent=5 // pred_region
        %s237 = ssub.s32 %s24, 1
        // Predicated region
        $region13: #{sgqa_forward.1} parent=11 // pred_check
          %p238 = pneg %p71
        $region14: #{sgqa_forward.1} parent=11 // pred_check_branch
          %240 = sbr.rel (%p238) target = $region16
        $region15: #{sgqa_forward.1} parent=11 // pred_region
          %s242 = ssub.s32 512, 512
          %243 = vsyncadd [#allocation7], %s242
          %s244 = sshll.u32 [#allocation6], 4
          %s245 = int_to_ptr.vmem [resolvable:$true] %s244
          %250 = dma.hbm_to_vmem [thread:$0]  %s1, 512, %s245, [#allocation7], 128, 128, 8
        $region16: #{sgqa_forward.1} parent=11 // pred_fallthru
          _
        // Predicated region
        $region17: #{sgqa_forward.1} parent=11 // pred_check
          %p251 = pneg %p92
        $region18: #{sgqa_forward.1} parent=11 // pred_check_branch
          %253 = sbr.rel (%p251) target = $region20
        $region19: #{sgqa_forward.1} parent=11 // pred_region
          %s255 = ssub.s32 512, 512
          %256 = vsyncadd [#allocation7], %s255
          %s257 = sshll.u32 [#allocation8], 4
          %s258 = int_to_ptr.vmem [resolvable:$true] %s257
          %263 = dma.hbm_to_vmem [thread:$0]  %s2, 512, %s258, [#allocation7], 128, 128, 8
        $region20: #{sgqa_forward.1} parent=11 // pred_fallthru
          _
        // Predicated region
        $region21: #{sgqa_forward.1} parent=11 // pred_check
          %p264 = pneg %p113
        $region22: #{sgqa_forward.1} parent=11 // pred_check_branch
          %266 = sbr.rel (%p264) target = $region24
        $region23: #{sgqa_forward.1} parent=11 // pred_region
          %s268 = ssub.s32 3072, 3072
          %269 = vsyncadd [#allocation10], %s268
          %s270 = sshll.u32 [#allocation9], 4
          %s271 = int_to_ptr.vmem [resolvable:$true] %s270
          %276 = dma.hbm_to_vmem [thread:$0]  %s3, 3072, %s271, [#allocation10], 384, 384, 24
        $region24: #{sgqa_forward.1} parent=11 // pred_fallthru
          _
        // Predicated region
        $region25: #{sgqa_forward.1} parent=11 // pred_check
          %p277 = pneg %p134
        $region26: #{sgqa_forward.1} parent=11 // pred_check_branch
          %279 = sbr.rel (%p277) target = $region28
        $region27: #{sgqa_forward.1} parent=11 // pred_region
          %s281 = ssub.s32 288, 288
          %282 = vsyncadd [#allocation10], %s281
          %s283 = sshll.u32 [#allocation11], 4
          %s284 = int_to_ptr.vmem [resolvable:$true] %s283
          %289 = dma.hbm_to_vmem [thread:$0]  %s4, 288, %s284, [#allocation10], 32, 32, 2
        $region28: #{sgqa_forward.1} parent=11 // pred_fallthru
          _
        // Predicated region
        $region29: #{sgqa_forward.1} parent=11 // pred_check
          %p290 = pneg %p155
        $region30: #{sgqa_forward.1} parent=11 // pred_check_branch
          %292 = sbr.rel (%p290) target = $region32
        $region31: #{sgqa_forward.1} parent=11 // pred_region
          %s294 = ssub.s32 512, 512
          %295 = vsyncadd [#allocation13], %s294
          %s296 = sshll.u32 [#allocation12], 4
          %s297 = int_to_ptr.vmem [resolvable:$true] %s296
          %302 = dma.hbm_to_vmem [thread:$0]  %s5, 512, %s297, [#allocation13], 128, 128, 8
        $region32: #{sgqa_forward.1} parent=11 // pred_fallthru
          _
        // Predicated region
        $region33: #{sgqa_forward.1} parent=11 // pred_check
          %p303 = pneg %p176
        $region34: #{sgqa_forward.1} parent=11 // pred_check_branch
          %305 = sbr.rel (%p303) target = $region36
        $region35: #{sgqa_forward.1} parent=11 // pred_region
          %s307 = ssub.s32 512, 512
          %308 = vsyncadd [#allocation13], %s307
          %s309 = sshll.u32 [#allocation14], 4
          %s310 = int_to_ptr.vmem [resolvable:$true] %s309
          %315 = dma.hbm_to_vmem [thread:$0]  %s6, 512, %s310, [#allocation13], 128, 128, 8
        $region36: #{sgqa_forward.1} parent=11 // pred_fallthru
          _
        // Predicated region
        $region37: #{sgqa_forward.1} parent=11 // pred_check
          %p316 = pneg %p197
        $region38: #{sgqa_forward.1} parent=11 // pred_check_branch
          %318 = sbr.rel (%p316) target = $region40
        $region39: #{sgqa_forward.1} parent=11 // pred_region
          %s320 = ssub.s32 512, 512
          %321 = vsyncadd [#allocation16], %s320
          %s322 = sshll.u32 [#allocation15], 4
          %s323 = int_to_ptr.vmem [resolvable:$true] %s322
          %328 = dma.hbm_to_vmem [thread:$0]  %s7, 512, %s323, [#allocation16], 128, 128, 8
        $region40: #{sgqa_forward.1} parent=11 // pred_fallthru
          _
      $region12: #{sgqa_forward.1} parent=5 // pred_fallthru
        _
      %p329 = scmp.lt.s32.totalorder %s24, 2
      // Predicated region
      $region41: #{sgqa_forward.1} parent=5 // pred_check
        %p330 = pneg %p329
      $region42: #{sgqa_forward.1} parent=5 // pred_check_branch
        %332 = sbr.rel (%p330) target = $region44
      $region43: #{sgqa_forward.1} parent=5 // pred_region
        // Predicated region
        $region45: #{sgqa_forward.1} parent=43 // pred_check
          %p333 = pneg %p44
        $region46: #{sgqa_forward.1} parent=43 // pred_check_branch
          %335 = sbr.rel (%p333) target = $region48
        $region47: #{sgqa_forward.1} parent=43 // pred_region
          %s336 = sand.u32 %s34, 1
          %s337 = scalar_lea.sflag [#allocation4], %s336
          %s338 = sand.u32 %s34, 1
          %s339 = smul.addr %s338, 64
          %s340 = scalar_lea.vmem [#allocation3], %s339
          %s342 = ssub.s32 1024, 1024
          %343 = vsyncadd %s337, %s342
          %s344 = smul.addr %s24, 8
          %s345 = smul.addr %s344, 128
          %s346 = scalar_lea.hbm %s0, %s345
          %s347 = sshll.u32 %s340, 4
          %s348 = int_to_ptr.vmem [resolvable:$true] %s347
          %353 = dma.hbm_to_vmem [thread:$0]  %s346, 1024, %s348, %s337, 256, 256, 16
        $region48: #{sgqa_forward.1} parent=43 // pred_fallthru
          _
      $region44: #{sgqa_forward.1} parent=5 // pred_fallthru
        _
      %p354 = scmp.le.s32.totalorder 1, %s24
      %p355 = scmp.lt.s32.totalorder %s24, 3
      %p356 = pnand %p354, %p355
      %p357 = pneg %p356
      // Predicated region
      $region49: #{sgqa_forward.1} parent=5 // pred_check
        _
      $region50: #{sgqa_forward.1} parent=5 // pred_check_branch
        %359 = sbr.rel (%p356) target = $region52
      $region51: #{sgqa_forward.1} parent=5 // pred_region
        %s360 = ssub.s32 %s24, 1
        %s361 = sand.u32 %s37, 1
        %s362 = scalar_lea.sflag [#allocation4], %s361
        %s363 = sand.u32 %s37, 1
        %s364 = smul.addr %s363, 64
        %s365 = scalar_lea.vmem [#allocation3], %s364
        // Predicated region
        $region53: #{sgqa_forward.1} parent=51 // pred_check
          %p366 = pneg %p50
        $region54: #{sgqa_forward.1} parent=51 // pred_check_branch
          %368 = sbr.rel (%p366) target = $region56
        $region55: #{sgqa_forward.1} parent=51 // pred_region
          %369 = dma.done %s362, 1024
        $region56: #{sgqa_forward.1} parent=51 // pred_fallthru
          _
        // Predicated region
        $region57: #{sgqa_forward.1} parent=51 // pred_check
          %p370 = pneg %p71
        $region58: #{sgqa_forward.1} parent=51 // pred_check_branch
          %372 = sbr.rel (%p370) target = $region60
        $region59: #{sgqa_forward.1} parent=51 // pred_region
          %373 = dma.done [#allocation7], 512
        $region60: #{sgqa_forward.1} parent=51 // pred_fallthru
          _
        // Predicated region
        $region61: #{sgqa_forward.1} parent=51 // pred_check
          %p374 = pneg %p92
        $region62: #{sgqa_forward.1} parent=51 // pred_check_branch
          %376 = sbr.rel (%p374) target = $region64
        $region63: #{sgqa_forward.1} parent=51 // pred_region
          %377 = dma.done [#allocation7], 512
        $region64: #{sgqa_forward.1} parent=51 // pred_fallthru
          _
        // Predicated region
        $region65: #{sgqa_forward.1} parent=51 // pred_check
          %p378 = pneg %p113
        $region66: #{sgqa_forward.1} parent=51 // pred_check_branch
          %380 = sbr.rel (%p378) target = $region68
        $region67: #{sgqa_forward.1} parent=51 // pred_region
          %381 = dma.done [#allocation10], 3072
        $region68: #{sgqa_forward.1} parent=51 // pred_fallthru
          _
        // Predicated region
        $region69: #{sgqa_forward.1} parent=51 // pred_check
          %p382 = pneg %p134
        $region70: #{sgqa_forward.1} parent=51 // pred_check_branch
          %384 = sbr.rel (%p382) target = $region72
        $region71: #{sgqa_forward.1} parent=51 // pred_region
          %385 = dma.done [#allocation10], 288
        $region72: #{sgqa_forward.1} parent=51 // pred_fallthru
          _
        // Predicated region
        $region73: #{sgqa_forward.1} parent=51 // pred_check
          %p386 = pneg %p155
        $region74: #{sgqa_forward.1} parent=51 // pred_check_branch
          %388 = sbr.rel (%p386) target = $region76
        $region75: #{sgqa_forward.1} parent=51 // pred_region
          %389 = dma.done [#allocation13], 512
        $region76: #{sgqa_forward.1} parent=51 // pred_fallthru
          _
        // Predicated region
        $region77: #{sgqa_forward.1} parent=51 // pred_check
          %p390 = pneg %p176
        $region78: #{sgqa_forward.1} parent=51 // pred_check_branch
          %392 = sbr.rel (%p390) target = $region80
        $region79: #{sgqa_forward.1} parent=51 // pred_region
          %393 = dma.done [#allocation13], 512
        $region80: #{sgqa_forward.1} parent=51 // pred_fallthru
          _
        // Predicated region
        $region81: #{sgqa_forward.1} parent=51 // pred_check
          %p394 = pneg %p197
        $region82: #{sgqa_forward.1} parent=51 // pred_check_branch
          %396 = sbr.rel (%p394) target = $region84
        $region83: #{sgqa_forward.1} parent=51 // pred_region
          %397 = dma.done [#allocation16], 512
        $region84: #{sgqa_forward.1} parent=51 // pred_fallthru
          _
        %s398 = sand.u32 %s37, 1
        %s399 = scalar_lea.sflag [#allocation4], %s398
        %s400 = sand.u32 %s37, 1
        %s401 = smul.addr %s400, 64
        %s402 = scalar_lea.vmem [#allocation3], %s401
        %p403 = pneg %p50
        %p404 = pneg %p47
        %p405 = pneg %p71
        %p406 = pneg %p68
        %p407 = pneg %p92
        %p408 = pneg %p89
        %p409 = pneg %p113
        %p410 = pneg %p110
        %p411 = pneg %p134
        %p412 = pneg %p131
        %p413 = pneg %p155
        %p414 = pneg %p152
        %p415 = pneg %p176
        %p416 = pneg %p173
        %p417 = pneg %p197
        %p418 = pneg %p194
        %p419 = pneg %p223
        %p420 = pneg %p220
        %s421 = sand.u32 %s210, 1
        %s422 = scalar_lea.sflag [#allocation5], %s421
        %s423 = sand.u32 %s210, 1
        %s424 = smul.addr %s423, 64
        %s425 = scalar_lea.vmem [#allocation17], %s424
        %v426 = vld [vmem:[%s365] sm:$0xff]
        %v427 = vld [vmem:[%s365 + $0x8] sm:$0xff]
        %v428 = vld [vmem:[%s365 + $0x10] sm:$0xff]
        %v429 = vld [vmem:[%s365 + $0x18] sm:$0xff]
        %v430 = vld [vmem:[%s365 + $0x20] sm:$0xff]
        %v431 = vld [vmem:[%s365 + $0x28] sm:$0xff]
        %v432 = vld [vmem:[%s365 + $0x30] sm:$0xff]
        %v433 = vld [vmem:[%s365 + $0x38] sm:$0xff]
        %v434 = vadd.f32 %v426, %v428
        %v435 = vadd.f32 %v434, %v430
        %v436 = vadd.f32 %v435, %v432
        %v437 = vrot.slane %v436, 4
        %v438 = vadd.f32 %v436, %v437
        %v439 = vrot.slane %v438, 2
        %v440 = vadd.f32 %v438, %v439
        %v441 = vrot.slane %v440, 1
        %v442 = vadd.f32 %v440, %v441
        %v443 = vadd.f32 %v427, %v429
        %v444 = vadd.f32 %v443, %v431
        %v445 = vadd.f32 %v444, %v433
        %v446 = vrot.slane %v445, 4
        %v447 = vadd.f32 %v445, %v446
        %v448 = vrot.slane %v447, 2
        %v449 = vadd.f32 %v447, %v448
        %v450 = vrot.slane %v449, 1
        %v451 = vadd.f32 %v449, %v450
        %v452 = vrcp.pop 32.0
        %v453 = vmul.f32 %v442, %v452
        %v454 = vmul.f32 %v451, %v452
        %v455 = vsub.f32 %v426, %v453
        %v456 = vsub.f32 %v427, %v454
        %v457 = vsub.f32 %v428, %v453
        %v458 = vsub.f32 %v429, %v454
        %v459 = vsub.f32 %v430, %v453
        %v460 = vsub.f32 %v431, %v454
        %v461 = vsub.f32 %v432, %v453
        %v462 = vsub.f32 %v433, %v454
        %v463 = vmul.f32 %v455, %v455
        %v464 = vmul.f32 %v456, %v456
        %v465 = vmul.f32 %v457, %v457
        %v466 = vmul.f32 %v458, %v458
        %v467 = vmul.f32 %v459, %v459
        %v468 = vmul.f32 %v460, %v460
        %v469 = vmul.f32 %v461, %v461
        %v470 = vmul.f32 %v462, %v462
        %v471 = vadd.f32 %v463, %v465
        %v472 = vadd.f32 %v471, %v467
        %v473 = vadd.f32 %v472, %v469
        %v474 = vrot.slane %v473, 4
        %v475 = vadd.f32 %v473, %v474
        %v476 = vrot.slane %v475, 2
        %v477 = vadd.f32 %v475, %v476
        %v478 = vrot.slane %v477, 1
        %v479 = vadd.f32 %v477, %v478
        %v480 = vadd.f32 %v464, %v466
        %v481 = vadd.f32 %v480, %v468
        %v482 = vadd.f32 %v481, %v470
        %v483 = vrot.slane %v482, 4
        %v484 = vadd.f32 %v482, %v483
        %v485 = vrot.slane %v484, 2
        %v486 = vadd.f32 %v484, %v485
        %v487 = vrot.slane %v486, 1
        %v488 = vadd.f32 %v486, %v487
        %v489 = vmul.f32 %v479, %v452
        %v490 = vmul.f32 %v488, %v452
        %v491 = vadd.f32 %v489, 1e-05
        %v492 = vadd.f32 %v490, 1e-05
        %v493 = vrsqrt.pop %v491
        %v494 = vrsqrt.pop %v492
        %v495 = vmul.f32 %v455, %v493
        %v496 = vmul.f32 %v456, %v494
        %v497 = vmul.f32 %v457, %v493
        %v498 = vmul.f32 %v458, %v494
        %v499 = vmul.f32 %v459, %v493
        %v500 = vmul.f32 %v460, %v494
        %v501 = vmul.f32 %v461, %v493
        %v502 = vmul.f32 %v462, %v494
        %v503 = vld [vmem:[#allocation6] sm:$0xff]
        %v504 = vld [vmem:[#allocation6 + $0x8] sm:$0xff]
        %v505 = vld [vmem:[#allocation6 + $0x10] sm:$0xff]
        %v506 = vld [vmem:[#allocation6 + $0x18] sm:$0xff]
        %508 = vset.pattern.permute.xlu0 0
        %509 = vperm.xlu0 %508, %v503
        %v510 = vpop.permute.xlu0 %509
        %513 = vset.pattern.permute.xlu0 0
        %514 = vperm.xlu0 %513, %v504
        %v515 = vpop.permute.xlu0 %514
        %518 = vset.pattern.permute.xlu0 0
        %519 = vperm.xlu0 %518, %v505
        %v520 = vpop.permute.xlu0 %519
        %523 = vset.pattern.permute.xlu0 0
        %524 = vperm.xlu0 %523, %v506
        %v525 = vpop.permute.xlu0 %524
        %v527 = vmul.f32 %v495, %v510
        %v528 = vmul.f32 %v496, %v510
        %v529 = vmul.f32 %v497, %v515
        %v530 = vmul.f32 %v498, %v515
        %v531 = vmul.f32 %v499, %v520
        %v532 = vmul.f32 %v500, %v520
        %v533 = vmul.f32 %v501, %v525
        %v534 = vmul.f32 %v502, %v525
        %v535 = vld [vmem:[#allocation8] sm:$0xff]
        %v536 = vld [vmem:[#allocation8 + $0x8] sm:$0xff]
        %v537 = vld [vmem:[#allocation8 + $0x10] sm:$0xff]
        %v538 = vld [vmem:[#allocation8 + $0x18] sm:$0xff]
        %540 = vset.pattern.permute.xlu0 0
        %541 = vperm.xlu0 %540, %v535
        %v542 = vpop.permute.xlu0 %541
        %545 = vset.pattern.permute.xlu0 0
        %546 = vperm.xlu0 %545, %v536
        %v547 = vpop.permute.xlu0 %546
        %550 = vset.pattern.permute.xlu0 0
        %551 = vperm.xlu0 %550, %v537
        %v552 = vpop.permute.xlu0 %551
        %555 = vset.pattern.permute.xlu0 0
        %556 = vperm.xlu0 %555, %v538
        %v557 = vpop.permute.xlu0 %556
        %v559 = vadd.f32 %v527, %v542
        %v560 = vadd.f32 %v528, %v542
        %v561 = vadd.f32 %v529, %v547
        %v562 = vadd.f32 %v530, %v547
        %v563 = vadd.f32 %v531, %v552
        %v564 = vadd.f32 %v532, %v552
        %v565 = vadd.f32 %v533, %v557
        %v566 = vadd.f32 %v534, %v557
        %567 = vrot.lane.b32.xlu0 %v559, 17
        %v568 = vpop.permute.xlu0 %567
        %569 = vrot.lane.b32.xlu0 %v561, 17
        %v570 = vpop.permute.xlu0 %569
        %571 = vrot.lane.b32.xlu0 %v563, 17
        %v572 = vpop.permute.xlu0 %571
        %573 = vrot.lane.b32.xlu0 %v565, 17
        %v574 = vpop.permute.xlu0 %573
        %575 = vrot.lane.b32.xlu0 %v560, 17
        %v576 = vpop.permute.xlu0 %575
        %577 = vrot.lane.b32.xlu0 %v562, 17
        %v578 = vpop.permute.xlu0 %577
        %579 = vrot.lane.b32.xlu0 %v564, 17
        %v580 = vpop.permute.xlu0 %579
        %581 = vrot.lane.b32.xlu0 %v566, 17
        %v582 = vpop.permute.xlu0 %581
        %v583 = vlaneseq
        %v584 = vand.u32 %v583, 127
        %vm585 = vcmp.lt.s32.totalorder %v584, 17
        %v586 = vsel %vm585, %v568, %v576
        %v587 = vsel %vm585, %v570, %v578
        %v588 = vsel %vm585, %v572, %v580
        %v589 = vsel %vm585, %v574, %v582
        %v590 = vsel %vm585, %v576, %v568
        %v591 = vsel %vm585, %v578, %v570
        %v592 = vsel %vm585, %v580, %v572
        %v593 = vsel %vm585, %v582, %v574
        %v594 = vld [vmem:[#allocation11] sm:$0x3]
        %v596 = vlaneseq
        %v597 = vshrl.u32 %v596, 7
        %v598 = vsub.s32 0, %v597
        %v599 = vrot.slane %v594, %v598
        %v600 = vlaneseq
        %v601 = vshrl.u32 %v600, 7
        %v602 = vsub.s32 1, %v601
        %v603 = vrot.slane %v594, %v602
        %v606 = vmul.f32 %v590, %v599
        %v607 = vmul.f32 %v586, %v603
        %v608 = vmul.f32 %v591, %v599
        %v609 = vmul.f32 %v587, %v603
        %v610 = vmul.f32 %v592, %v599
        %v611 = vmul.f32 %v588, %v603
        %v612 = vmul.f32 %v593, %v599
        %v613 = vmul.f32 %v589, %v603
        %614 = vst [vmem:[#allocation2] sm:$0xff] %v606
        %615 = vst [vmem:[#allocation2 + $0x8] sm:$0xff] %v607
        %616 = vst [vmem:[#allocation2 + $0x10] sm:$0xff] %v608
        %617 = vst [vmem:[#allocation2 + $0x18] sm:$0xff] %v609
        %618 = vst [vmem:[#allocation2 + $0x20] sm:$0xff] %v610
        %619 = vst [vmem:[#allocation2 + $0x28] sm:$0xff] %v611
        %620 = vst [vmem:[#allocation2 + $0x30] sm:$0xff] %v612
        %621 = vst [vmem:[#allocation2 + $0x38] sm:$0xff] %v613
        %622 = vrot.lane.b32.xlu0 %v559, 16
        %v623 = vpop.permute.xlu0 %622
        %624 = vrot.lane.b32.xlu0 %v561, 16
        %v625 = vpop.permute.xlu0 %624
        %626 = vrot.lane.b32.xlu0 %v563, 16
        %v627 = vpop.permute.xlu0 %626
        %628 = vrot.lane.b32.xlu0 %v565, 16
        %v629 = vpop.permute.xlu0 %628
        %630 = vrot.lane.b32.xlu0 %v560, 16
        %v631 = vpop.permute.xlu0 %630
        %632 = vrot.lane.b32.xlu0 %v562, 16
        %v633 = vpop.permute.xlu0 %632
        %634 = vrot.lane.b32.xlu0 %v564, 16
        %v635 = vpop.permute.xlu0 %634
        %636 = vrot.lane.b32.xlu0 %v566, 16
        %v637 = vpop.permute.xlu0 %636
        %vm638 = vcmp.lt.s32.totalorder %v584, 16
        %v639 = vsel %vm638, %v623, %v631
        %v640 = vsel %vm638, %v625, %v633
        %v641 = vsel %vm638, %v627, %v635
        %v642 = vsel %vm638, %v629, %v637
        %v643 = vsel %vm638, %v631, %v623
        %v644 = vsel %vm638, %v633, %v625
        %v645 = vsel %vm638, %v635, %v627
        %v646 = vsel %vm638, %v637, %v629
        %s647 = scalar_lea.vmem [#allocation11], 2
        %v648 = vld [vmem:[%s647] sm:$0x3]
        %v650 = vlaneseq
        %v651 = vshrl.u32 %v650, 7
        %v652 = vsub.s32 0, %v651
        %v653 = vrot.slane %v648, %v652
        %v654 = vlaneseq
        %v655 = vshrl.u32 %v654, 7
        %v656 = vsub.s32 1, %v655
        %v657 = vrot.slane %v648, %v656
        %v660 = vmul.f32 %v643, %v653
        %v661 = vmul.f32 %v639, %v657
        %v662 = vmul.f32 %v644, %v653
        %v663 = vmul.f32 %v640, %v657
        %v664 = vmul.f32 %v645, %v653
        %v665 = vmul.f32 %v641, %v657
        %v666 = vmul.f32 %v646, %v653
        %v667 = vmul.f32 %v642, %v657
        %668 = vst [vmem:[#allocation2 + $0x40] sm:$0xff] %v660
        %669 = vst [vmem:[#allocation2 + $0x48] sm:$0xff] %v661
        %670 = vst [vmem:[#allocation2 + $0x50] sm:$0xff] %v662
        %671 = vst [vmem:[#allocation2 + $0x58] sm:$0xff] %v663
        %672 = vst [vmem:[#allocation2 + $0x60] sm:$0xff] %v664
        %673 = vst [vmem:[#allocation2 + $0x68] sm:$0xff] %v665
        %674 = vst [vmem:[#allocation2 + $0x70] sm:$0xff] %v666
        %675 = vst [vmem:[#allocation2 + $0x78] sm:$0xff] %v667
        %676 = vrot.lane.b32.xlu0 %v559, 15
        %v677 = vpop.permute.xlu0 %676
        %678 = vrot.lane.b32.xlu0 %v561, 15
        %v679 = vpop.permute.xlu0 %678
        %680 = vrot.lane.b32.xlu0 %v563, 15
        %v681 = vpop.permute.xlu0 %680
        %682 = vrot.lane.b32.xlu0 %v565, 15
        %v683 = vpop.permute.xlu0 %682
        %684 = vrot.lane.b32.xlu0 %v560, 15
        %v685 = vpop.permute.xlu0 %684
        %686 = vrot.lane.b32.xlu0 %v562, 15
        %v687 = vpop.permute.xlu0 %686
        %688 = vrot.lane.b32.xlu0 %v564, 15
        %v689 = vpop.permute.xlu0 %688
        %690 = vrot.lane.b32.xlu0 %v566, 15
        %v691 = vpop.permute.xlu0 %690
        %vm692 = vcmp.lt.s32.totalorder %v584, 15
        %v693 = vsel %vm692, %v677, %v685
        %v694 = vsel %vm692, %v679, %v687
        %v695 = vsel %vm692, %v681, %v689
        %v696 = vsel %vm692, %v683, %v691
        %v697 = vsel %vm692, %v685, %v677
        %v698 = vsel %vm692, %v687, %v679
        %v699 = vsel %vm692, %v689, %v681
        %v700 = vsel %vm692, %v691, %v683
        %s701 = scalar_lea.vmem [#allocation11], 4
        %v702 = vld [vmem:[%s701] sm:$0x3]
        %v704 = vlaneseq
        %v705 = vshrl.u32 %v704, 7
        %v706 = vsub.s32 0, %v705
        %v707 = vrot.slane %v702, %v706
        %v708 = vlaneseq
        %v709 = vshrl.u32 %v708, 7
        %v710 = vsub.s32 1, %v709
        %v711 = vrot.slane %v702, %v710
        %v714 = vmul.f32 %v697, %v707
        %v715 = vmul.f32 %v693, %v711
        %v716 = vmul.f32 %v698, %v707
        %v717 = vmul.f32 %v694, %v711
        %v718 = vmul.f32 %v699, %v707
        %v719 = vmul.f32 %v695, %v711
        %v720 = vmul.f32 %v700, %v707
        %v721 = vmul.f32 %v696, %v711
        %722 = vst [vmem:[#allocation2 + $0x80] sm:$0xff] %v714
        %723 = vst [vmem:[#allocation2 + $0x88] sm:$0xff] %v715
        %724 = vst [vmem:[#allocation2 + $0x90] sm:$0xff] %v716
        %725 = vst [vmem:[#allocation2 + $0x98] sm:$0xff] %v717
        %726 = vst [vmem:[#allocation2 + $0xa0] sm:$0xff] %v718
        %727 = vst [vmem:[#allocation2 + $0xa8] sm:$0xff] %v719
        %728 = vst [vmem:[#allocation2 + $0xb0] sm:$0xff] %v720
        %729 = vst [vmem:[#allocation2 + $0xb8] sm:$0xff] %v721
        %730 = vrot.lane.b32.xlu0 %v559, 1
        %v731 = vpop.permute.xlu0 %730
        %732 = vrot.lane.b32.xlu0 %v561, 1
        %v733 = vpop.permute.xlu0 %732
        %734 = vrot.lane.b32.xlu0 %v563, 1
        %v735 = vpop.permute.xlu0 %734
        %736 = vrot.lane.b32.xlu0 %v565, 1
        %v737 = vpop.permute.xlu0 %736
        %738 = vrot.lane.b32.xlu0 %v560, 1
        %v739 = vpop.permute.xlu0 %738
        %740 = vrot.lane.b32.xlu0 %v562, 1
        %v741 = vpop.permute.xlu0 %740
        %742 = vrot.lane.b32.xlu0 %v564, 1
        %v743 = vpop.permute.xlu0 %742
        %744 = vrot.lane.b32.xlu0 %v566, 1
        %v745 = vpop.permute.xlu0 %744
        %vm746 = vcmp.lt.s32.totalorder %v584, 1
        %v747 = vsel %vm746, %v731, %v739
        %v748 = vsel %vm746, %v733, %v741
        %v749 = vsel %vm746, %v735, %v743
        %v750 = vsel %vm746, %v737, %v745
        %v751 = vsel %vm746, %v739, %v731
        %v752 = vsel %vm746, %v741, %v733
        %v753 = vsel %vm746, %v743, %v735
        %v754 = vsel %vm746, %v745, %v737
        %s755 = scalar_lea.vmem [#allocation11], 6
        %v756 = vld [vmem:[%s755] sm:$0x3]
        %v758 = vlaneseq
        %v759 = vshrl.u32 %v758, 7
        %v760 = vsub.s32 0, %v759
        %v761 = vrot.slane %v756, %v760
        %v762 = vlaneseq
        %v763 = vshrl.u32 %v762, 7
        %v764 = vsub.s32 1, %v763
        %v765 = vrot.slane %v756, %v764
        %v768 = vmul.f32 %v751, %v761
        %v769 = vmul.f32 %v747, %v765
        %v770 = vmul.f32 %v752, %v761
        %v771 = vmul.f32 %v748, %v765
        %v772 = vmul.f32 %v753, %v761
        %v773 = vmul.f32 %v749, %v765
        %v774 = vmul.f32 %v754, %v761
        %v775 = vmul.f32 %v750, %v765
        %776 = vst [vmem:[#allocation2 + $0xc0] sm:$0xff] %v768
        %777 = vst [vmem:[#allocation2 + $0xc8] sm:$0xff] %v769
        %778 = vst [vmem:[#allocation2 + $0xd0] sm:$0xff] %v770
        %779 = vst [vmem:[#allocation2 + $0xd8] sm:$0xff] %v771
        %780 = vst [vmem:[#allocation2 + $0xe0] sm:$0xff] %v772
        %781 = vst [vmem:[#allocation2 + $0xe8] sm:$0xff] %v773
        %782 = vst [vmem:[#allocation2 + $0xf0] sm:$0xff] %v774
        %783 = vst [vmem:[#allocation2 + $0xf8] sm:$0xff] %v775
        %784 = vst [vmem:[#allocation2 + $0x100] sm:$0xff] %v559
        %785 = vst [vmem:[#allocation2 + $0x108] sm:$0xff] %v560
        %786 = vst [vmem:[#allocation2 + $0x110] sm:$0xff] %v561
        %787 = vst [vmem:[#allocation2 + $0x118] sm:$0xff] %v562
        %788 = vst [vmem:[#allocation2 + $0x120] sm:$0xff] %v563
        %789 = vst [vmem:[#allocation2 + $0x128] sm:$0xff] %v564
        %790 = vst [vmem:[#allocation2 + $0x130] sm:$0xff] %v565
        %791 = vst [vmem:[#allocation2 + $0x138] sm:$0xff] %v566
        %792 = vrot.lane.b32.xlu0 %v559, 127
        %v793 = vpop.permute.xlu0 %792
        %794 = vrot.lane.b32.xlu0 %v561, 127
        %v795 = vpop.permute.xlu0 %794
        %796 = vrot.lane.b32.xlu0 %v563, 127
        %v797 = vpop.permute.xlu0 %796
        %798 = vrot.lane.b32.xlu0 %v565, 127
        %v799 = vpop.permute.xlu0 %798
        %800 = vrot.lane.b32.xlu0 %v560, 127
        %v801 = vpop.permute.xlu0 %800
        %802 = vrot.lane.b32.xlu0 %v562, 127
        %v803 = vpop.permute.xlu0 %802
        %804 = vrot.lane.b32.xlu0 %v564, 127
        %v805 = vpop.permute.xlu0 %804
        %806 = vrot.lane.b32.xlu0 %v566, 127
        %v807 = vpop.permute.xlu0 %806
        %vm808 = vcmp.lt.s32.totalorder %v584, 127
        %v809 = vsel %vm808, %v793, %v801
        %v810 = vsel %vm808, %v795, %v803
        %v811 = vsel %vm808, %v797, %v805
        %v812 = vsel %vm808, %v799, %v807
        %v813 = vsel %vm808, %v801, %v793
        %v814 = vsel %vm808, %v803, %v795
        %v815 = vsel %vm808, %v805, %v797
        %v816 = vsel %vm808, %v807, %v799
        %s817 = scalar_lea.vmem [#allocation11], 10
        %v818 = vld [vmem:[%s817] sm:$0x3]
        %v820 = vlaneseq
        %v821 = vshrl.u32 %v820, 7
        %v822 = vsub.s32 0, %v821
        %v823 = vrot.slane %v818, %v822
        %v824 = vlaneseq
        %v825 = vshrl.u32 %v824, 7
        %v826 = vsub.s32 1, %v825
        %v827 = vrot.slane %v818, %v826
        %v830 = vmul.f32 %v809, %v823
        %v831 = vmul.f32 %v813, %v827
        %v832 = vmul.f32 %v810, %v823
        %v833 = vmul.f32 %v814, %v827
        %v834 = vmul.f32 %v811, %v823
        %v835 = vmul.f32 %v815, %v827
        %v836 = vmul.f32 %v812, %v823
        %v837 = vmul.f32 %v816, %v827
        %838 = vst [vmem:[#allocation2 + $0x140] sm:$0xff] %v830
        %839 = vst [vmem:[#allocation2 + $0x148] sm:$0xff] %v831
        %840 = vst [vmem:[#allocation2 + $0x150] sm:$0xff] %v832
        %841 = vst [vmem:[#allocation2 + $0x158] sm:$0xff] %v833
        %842 = vst [vmem:[#allocation2 + $0x160] sm:$0xff] %v834
        %843 = vst [vmem:[#allocation2 + $0x168] sm:$0xff] %v835
        %844 = vst [vmem:[#allocation2 + $0x170] sm:$0xff] %v836
        %845 = vst [vmem:[#allocation2 + $0x178] sm:$0xff] %v837
        %846 = vrot.lane.b32.xlu0 %v559, 113
        %v847 = vpop.permute.xlu0 %846
        %848 = vrot.lane.b32.xlu0 %v561, 113
        %v849 = vpop.permute.xlu0 %848
        %850 = vrot.lane.b32.xlu0 %v563, 113
        %v851 = vpop.permute.xlu0 %850
        %852 = vrot.lane.b32.xlu0 %v565, 113
        %v853 = vpop.permute.xlu0 %852
        %854 = vrot.lane.b32.xlu0 %v560, 113
        %v855 = vpop.permute.xlu0 %854
        %856 = vrot.lane.b32.xlu0 %v562, 113
        %v857 = vpop.permute.xlu0 %856
        %858 = vrot.lane.b32.xlu0 %v564, 113
        %v859 = vpop.permute.xlu0 %858
        %860 = vrot.lane.b32.xlu0 %v566, 113
        %v861 = vpop.permute.xlu0 %860
        %vm862 = vcmp.lt.s32.totalorder %v584, 113
        %v863 = vsel %vm862, %v847, %v855
        %v864 = vsel %vm862, %v849, %v857
        %v865 = vsel %vm862, %v851, %v859
        %v866 = vsel %vm862, %v853, %v861
        %v867 = vsel %vm862, %v855, %v847
        %v868 = vsel %vm862, %v857, %v849
        %v869 = vsel %vm862, %v859, %v851
        %v870 = vsel %vm862, %v861, %v853
        %s871 = scalar_lea.vmem [#allocation11], 12
        %v872 = vld [vmem:[%s871] sm:$0x3]
        %v874 = vlaneseq
        %v875 = vshrl.u32 %v874, 7
        %v876 = vsub.s32 0, %v875
        %v877 = vrot.slane %v872, %v876
        %v878 = vlaneseq
        %v879 = vshrl.u32 %v878, 7
        %v880 = vsub.s32 1, %v879
        %v881 = vrot.slane %v872, %v880
        %v884 = vmul.f32 %v863, %v877
        %v885 = vmul.f32 %v867, %v881
        %v886 = vmul.f32 %v864, %v877
        %v887 = vmul.f32 %v868, %v881
        %v888 = vmul.f32 %v865, %v877
        %v889 = vmul.f32 %v869, %v881
        %v890 = vmul.f32 %v866, %v877
        %v891 = vmul.f32 %v870, %v881
        %892 = vst [vmem:[#allocation2 + $0x180] sm:$0xff] %v884
        %893 = vst [vmem:[#allocation2 + $0x188] sm:$0xff] %v885
        %894 = vst [vmem:[#allocation2 + $0x190] sm:$0xff] %v886
        %895 = vst [vmem:[#allocation2 + $0x198] sm:$0xff] %v887
        %896 = vst [vmem:[#allocation2 + $0x1a0] sm:$0xff] %v888
        %897 = vst [vmem:[#allocation2 + $0x1a8] sm:$0xff] %v889
        %898 = vst [vmem:[#allocation2 + $0x1b0] sm:$0xff] %v890
        %899 = vst [vmem:[#allocation2 + $0x1b8] sm:$0xff] %v891
        %900 = vrot.lane.b32.xlu0 %v559, 112
        %v901 = vpop.permute.xlu0 %900
        %902 = vrot.lane.b32.xlu0 %v561, 112
        %v903 = vpop.permute.xlu0 %902
        %904 = vrot.lane.b32.xlu0 %v563, 112
        %v905 = vpop.permute.xlu0 %904
        %906 = vrot.lane.b32.xlu0 %v565, 112
        %v907 = vpop.permute.xlu0 %906
        %908 = vrot.lane.b32.xlu0 %v560, 112
        %v909 = vpop.permute.xlu0 %908
        %910 = vrot.lane.b32.xlu0 %v562, 112
        %v911 = vpop.permute.xlu0 %910
        %912 = vrot.lane.b32.xlu0 %v564, 112
        %v913 = vpop.permute.xlu0 %912
        %914 = vrot.lane.b32.xlu0 %v566, 112
        %v915 = vpop.permute.xlu0 %914
        %vm916 = vcmp.lt.s32.totalorder %v584, 112
        %v917 = vsel %vm916, %v901, %v909
        %v918 = vsel %vm916, %v903, %v911
        %v919 = vsel %vm916, %v905, %v913
        %v920 = vsel %vm916, %v907, %v915
        %v921 = vsel %vm916, %v909, %v901
        %v922 = vsel %vm916, %v911, %v903
        %v923 = vsel %vm916, %v913, %v905
        %v924 = vsel %vm916, %v915, %v907
        %s925 = scalar_lea.vmem [#allocation11], 14
        %v926 = vld [vmem:[%s925] sm:$0x3]
        %v928 = vlaneseq
        %v929 = vshrl.u32 %v928, 7
        %v930 = vsub.s32 0, %v929
        %v931 = vrot.slane %v926, %v930
        %v932 = vlaneseq
        %v933 = vshrl.u32 %v932, 7
        %v934 = vsub.s32 1, %v933
        %v935 = vrot.slane %v926, %v934
        %v938 = vmul.f32 %v917, %v931
        %v939 = vmul.f32 %v921, %v935
        %v940 = vmul.f32 %v918, %v931
        %v941 = vmul.f32 %v922, %v935
        %v942 = vmul.f32 %v919, %v931
        %v943 = vmul.f32 %v923, %v935
        %v944 = vmul.f32 %v920, %v931
        %v945 = vmul.f32 %v924, %v935
        %946 = vst [vmem:[#allocation2 + $0x1c0] sm:$0xff] %v938
        %947 = vst [vmem:[#allocation2 + $0x1c8] sm:$0xff] %v939
        %948 = vst [vmem:[#allocation2 + $0x1d0] sm:$0xff] %v940
        %949 = vst [vmem:[#allocation2 + $0x1d8] sm:$0xff] %v941
        %950 = vst [vmem:[#allocation2 + $0x1e0] sm:$0xff] %v942
        %951 = vst [vmem:[#allocation2 + $0x1e8] sm:$0xff] %v943
        %952 = vst [vmem:[#allocation2 + $0x1f0] sm:$0xff] %v944
        %953 = vst [vmem:[#allocation2 + $0x1f8] sm:$0xff] %v945
        %954 = vrot.lane.b32.xlu0 %v559, 111
        %v955 = vpop.permute.xlu0 %954
        %956 = vrot.lane.b32.xlu0 %v561, 111
        %v957 = vpop.permute.xlu0 %956
        %958 = vrot.lane.b32.xlu0 %v563, 111
        %v959 = vpop.permute.xlu0 %958
        %960 = vrot.lane.b32.xlu0 %v565, 111
        %v961 = vpop.permute.xlu0 %960
        %962 = vrot.lane.b32.xlu0 %v560, 111
        %v963 = vpop.permute.xlu0 %962
        %964 = vrot.lane.b32.xlu0 %v562, 111
        %v965 = vpop.permute.xlu0 %964
        %966 = vrot.lane.b32.xlu0 %v564, 111
        %v967 = vpop.permute.xlu0 %966
        %968 = vrot.lane.b32.xlu0 %v566, 111
        %v969 = vpop.permute.xlu0 %968
        %vm970 = vcmp.lt.s32.totalorder %v584, 111
        %v971 = vsel %vm970, %v955, %v963
        %v972 = vsel %vm970, %v957, %v965
        %v973 = vsel %vm970, %v959, %v967
        %v974 = vsel %vm970, %v961, %v969
        %v975 = vsel %vm970, %v963, %v955
        %v976 = vsel %vm970, %v965, %v957
        %v977 = vsel %vm970, %v967, %v959
        %v978 = vsel %vm970, %v969, %v961
        %s979 = scalar_lea.vmem [#allocation11], 16
        %v980 = vld [vmem:[%s979] sm:$0x3]
        %v982 = vlaneseq
        %v983 = vshrl.u32 %v982, 7
        %v984 = vsub.s32 0, %v983
        %v985 = vrot.slane %v980, %v984
        %v986 = vlaneseq
        %v987 = vshrl.u32 %v986, 7
        %v988 = vsub.s32 1, %v987
        %v989 = vrot.slane %v980, %v988
        %v992 = vmul.f32 %v971, %v985
        %v993 = vmul.f32 %v975, %v989
        %v994 = vmul.f32 %v972, %v985
        %v995 = vmul.f32 %v976, %v989
        %v996 = vmul.f32 %v973, %v985
        %v997 = vmul.f32 %v977, %v989
        %v998 = vmul.f32 %v974, %v985
        %v999 = vmul.f32 %v978, %v989
        %1000 = vst [vmem:[#allocation2 + $0x200] sm:$0xff] %v992
        %1001 = vst [vmem:[#allocation2 + $0x208] sm:$0xff] %v993
        %1002 = vst [vmem:[#allocation2 + $0x210] sm:$0xff] %v994
        %1003 = vst [vmem:[#allocation2 + $0x218] sm:$0xff] %v995
        %1004 = vst [vmem:[#allocation2 + $0x220] sm:$0xff] %v996
        %1005 = vst [vmem:[#allocation2 + $0x228] sm:$0xff] %v997
        %1006 = vst [vmem:[#allocation2 + $0x230] sm:$0xff] %v998
        %1007 = vst [vmem:[#allocation2 + $0x238] sm:$0xff] %v999
        %v1008 = vld [vmem:[#allocation9] sm:$0xff]
        %v1009 = vld [vmem:[#allocation9 + $0x8] sm:$0xff]
        %v1010 = vld [vmem:[#allocation9 + $0x10] sm:$0xff]
        %v1011 = vld [vmem:[#allocation9 + $0x18] sm:$0xff]
        %v1012 = vld [vmem:[#allocation9 + $0x20] sm:$0xff]
        %v1013 = vld [vmem:[#allocation9 + $0x28] sm:$0xff]
        %v1014 = vld [vmem:[#allocation9 + $0x30] sm:$0xff]
        %v1015 = vld [vmem:[#allocation9 + $0x38] sm:$0xff]
        %v1016 = vld [vmem:[#allocation9 + $0x40] sm:$0xff]
        %v1017 = vld [vmem:[#allocation9 + $0x48] sm:$0xff]
        %v1018 = vld [vmem:[#allocation9 + $0x50] sm:$0xff]
        %v1019 = vld [vmem:[#allocation9 + $0x58] sm:$0xff]
        %v1020 = vld [vmem:[#allocation9 + $0x60] sm:$0xff]
        %v1021 = vld [vmem:[#allocation9 + $0x68] sm:$0xff]
        %v1022 = vld [vmem:[#allocation9 + $0x70] sm:$0xff]
        %v1023 = vld [vmem:[#allocation9 + $0x78] sm:$0xff]
        %v1024 = vld [vmem:[#allocation9 + $0x80] sm:$0xff]
        %v1025 = vld [vmem:[#allocation9 + $0x88] sm:$0xff]
        %v1026 = vld [vmem:[#allocation9 + $0x90] sm:$0xff]
        %v1027 = vld [vmem:[#allocation9 + $0x98] sm:$0xff]
        %v1028 = vld [vmem:[#allocation9 + $0xa0] sm:$0xff]
        %v1029 = vld [vmem:[#allocation9 + $0xa8] sm:$0xff]
        %v1030 = vld [vmem:[#allocation9 + $0xb0] sm:$0xff]
        %v1031 = vld [vmem:[#allocation9 + $0xb8] sm:$0xff]
        %v1032 = vld [vmem:[#allocation2] sm:$0xff]
        %v1033 = vld [vmem:[#allocation2 + $0x8] sm:$0xff]
        %v1034 = vld [vmem:[#allocation2 + $0x10] sm:$0xff]
        %v1035 = vld [vmem:[#allocation2 + $0x18] sm:$0xff]
        %v1036 = vld [vmem:[#allocation2 + $0x20] sm:$0xff]
        %v1037 = vld [vmem:[#allocation2 + $0x28] sm:$0xff]
        %v1038 = vld [vmem:[#allocation2 + $0x30] sm:$0xff]
        %v1039 = vld [vmem:[#allocation2 + $0x38] sm:$0xff]
        %v1040 = vld [vmem:[#allocation2 + $0x40] sm:$0xff]
        %v1041 = vld [vmem:[#allocation2 + $0x48] sm:$0xff]
        %v1042 = vld [vmem:[#allocation2 + $0x50] sm:$0xff]
        %v1043 = vld [vmem:[#allocation2 + $0x58] sm:$0xff]
        %v1044 = vld [vmem:[#allocation2 + $0x60] sm:$0xff]
        %v1045 = vld [vmem:[#allocation2 + $0x68] sm:$0xff]
        %v1046 = vld [vmem:[#allocation2 + $0x70] sm:$0xff]
        %v1047 = vld [vmem:[#allocation2 + $0x78] sm:$0xff]
        %v1048 = vld [vmem:[#allocation2 + $0x80] sm:$0xff]
        %v1049 = vld [vmem:[#allocation2 + $0x88] sm:$0xff]
        %v1050 = vld [vmem:[#allocation2 + $0x90] sm:$0xff]
        %v1051 = vld [vmem:[#allocation2 + $0x98] sm:$0xff]
        %v1052 = vld [vmem:[#allocation2 + $0xa0] sm:$0xff]
        %v1053 = vld [vmem:[#allocation2 + $0xa8] sm:$0xff]
        %v1054 = vld [vmem:[#allocation2 + $0xb0] sm:$0xff]
        %v1055 = vld [vmem:[#allocation2 + $0xb8] sm:$0xff]
        %v1056 = vld [vmem:[#allocation2 + $0xc0] sm:$0xff]
        %v1057 = vld [vmem:[#allocation2 + $0xc8] sm:$0xff]
        %v1058 = vld [vmem:[#allocation2 + $0xd0] sm:$0xff]
        %v1059 = vld [vmem:[#allocation2 + $0xd8] sm:$0xff]
        %v1060 = vld [vmem:[#allocation2 + $0xe0] sm:$0xff]
        %v1061 = vld [vmem:[#allocation2 + $0xe8] sm:$0xff]
        %v1062 = vld [vmem:[#allocation2 + $0xf0] sm:$0xff]
        %v1063 = vld [vmem:[#allocation2 + $0xf8] sm:$0xff]
        %v1064 = vld [vmem:[#allocation2 + $0x100] sm:$0xff]
        %v1065 = vld [vmem:[#allocation2 + $0x108] sm:$0xff]
        %v1066 = vld [vmem:[#allocation2 + $0x110] sm:$0xff]
        %v1067 = vld [vmem:[#allocation2 + $0x118] sm:$0xff]
        %v1068 = vld [vmem:[#allocation2 + $0x120] sm:$0xff]
        %v1069 = vld [vmem:[#allocation2 + $0x128] sm:$0xff]
        %v1070 = vld [vmem:[#allocation2 + $0x130] sm:$0xff]
        %v1071 = vld [vmem:[#allocation2 + $0x138] sm:$0xff]
        %v1072 = vld [vmem:[#allocation2 + $0x140] sm:$0xff]
        %v1073 = vld [vmem:[#allocation2 + $0x148] sm:$0xff]
        %v1074 = vld [vmem:[#allocation2 + $0x150] sm:$0xff]
        %v1075 = vld [vmem:[#allocation2 + $0x158] sm:$0xff]
        %v1076 = vld [vmem:[#allocation2 + $0x160] sm:$0xff]
        %v1077 = vld [vmem:[#allocation2 + $0x168] sm:$0xff]
        %v1078 = vld [vmem:[#allocation2 + $0x170] sm:$0xff]
        %v1079 = vld [vmem:[#allocation2 + $0x178] sm:$0xff]
        %v1080 = vld [vmem:[#allocation2 + $0x180] sm:$0xff]
        %v1081 = vld [vmem:[#allocation2 + $0x188] sm:$0xff]
        %v1082 = vld [vmem:[#allocation2 + $0x190] sm:$0xff]
        %v1083 = vld [vmem:[#allocation2 + $0x198] sm:$0xff]
        %v1084 = vld [vmem:[#allocation2 + $0x1a0] sm:$0xff]
        %v1085 = vld [vmem:[#allocation2 + $0x1a8] sm:$0xff]
        %v1086 = vld [vmem:[#allocation2 + $0x1b0] sm:$0xff]
        %v1087 = vld [vmem:[#allocation2 + $0x1b8] sm:$0xff]
        %v1088 = vld [vmem:[#allocation2 + $0x1c0] sm:$0xff]
        %v1089 = vld [vmem:[#allocation2 + $0x1c8] sm:$0xff]
        %v1090 = vld [vmem:[#allocation2 + $0x1d0] sm:$0xff]
        %v1091 = vld [vmem:[#allocation2 + $0x1d8] sm:$0xff]
        %v1092 = vld [vmem:[#allocation2 + $0x1e0] sm:$0xff]
        %v1093 = vld [vmem:[#allocation2 + $0x1e8] sm:$0xff]
        %v1094 = vld [vmem:[#allocation2 + $0x1f0] sm:$0xff]
        %v1095 = vld [vmem:[#allocation2 + $0x1f8] sm:$0xff]
        %v1096 = vld [vmem:[#allocation2 + $0x200] sm:$0xff]
        %v1097 = vld [vmem:[#allocation2 + $0x208] sm:$0xff]
        %v1098 = vld [vmem:[#allocation2 + $0x210] sm:$0xff]
        %v1099 = vld [vmem:[#allocation2 + $0x218] sm:$0xff]
        %v1100 = vld [vmem:[#allocation2 + $0x220] sm:$0xff]
        %v1101 = vld [vmem:[#allocation2 + $0x228] sm:$0xff]
        %v1102 = vld [vmem:[#allocation2 + $0x230] sm:$0xff]
        %v1103 = vld [vmem:[#allocation2 + $0x238] sm:$0xff]
        %vm1104 = vcmask 261120
        %v1106 = vsel %vm1104, %v1010, 0
        %v1109 = vsel %vm1104, %v1013, 0
        %v1112 = vsel %vm1104, %v1016, 0
        %v1115 = vsel %vm1104, %v1019, 0
        %v1118 = vsel %vm1104, %v1022, 0
        %v1121 = vsel %vm1104, %v1025, 0
        %v1124 = vsel %vm1104, %v1028, 0
        %v1127 = vsel %vm1104, %v1031, 0
        %1129 = vmatprep.subr.mxu0 %v1033
        %1130 = vmatpush1.msra.mxu0 %v1032
        %1131 = vmatprep.subr.mxu0 %v1035
        %1132 = vmatpush1.msra.mxu0 %v1034
        %1133 = vmatprep.subr.mxu0 %v1037
        %1134 = vmatpush1.msra.mxu0 %v1036
        %1135 = vmatprep.subr.mxu0 %v1039
        %1136 = vmatpush1.msra.mxu0 %v1038
        %1137 = vmatprep.subr.mxu0 %v1041
        %1138 = vmatpush1.msra.mxu0 %v1040
        %1139 = vmatprep.subr.mxu0 %v1043
        %1140 = vmatpush1.msra.mxu0 %v1042
        %1141 = vmatprep.subr.mxu0 %v1045
        %1142 = vmatpush1.msra.mxu0 %v1044
        %1143 = vmatprep.subr.mxu0 %v1047
        %1144 = vmatpush1.msra.mxu0 %v1046
        %1145 = vmatprep.subr.mxu0 %v1049
        %1146 = vmatpush1.msra.mxu0 %v1048
        %1147 = vmatprep.subr.mxu0 %v1051
        %1148 = vmatpush1.msra.mxu0 %v1050
        %1149 = vmatprep.subr.mxu0 %v1053
        %1150 = vmatpush1.msra.mxu0 %v1052
        %1151 = vmatprep.subr.mxu0 %v1055
        %1152 = vmatpush1.msra.mxu0 %v1054
        %1153 = vmatprep.subr.mxu0 %v1057
        %1154 = vmatpush1.msra.mxu0 %v1056
        %1155 = vmatprep.subr.mxu0 %v1059
        %1156 = vmatpush1.msra.mxu0 %v1058
        %1157 = vmatprep.subr.mxu0 %v1061
        %1158 = vmatpush1.msra.mxu0 %v1060
        %1159 = vmatprep.subr.mxu0 %v1063
        %1160 = vmatpush1.msra.mxu0 %v1062
        %1161 = vmatprep.subr.mxu0 %v1065
        %1162 = vmatpush1.msra.mxu0 %v1064
        %1163 = vmatprep.subr.mxu0 %v1067
        %1164 = vmatpush1.msra.mxu0 %v1066
        %1165 = vmatprep.subr.mxu0 %v1069
        %1166 = vmatpush1.msra.mxu0 %v1068
        %1167 = vmatprep.subr.mxu0 %v1071
        %1168 = vmatpush1.msra.mxu0 %v1070
        %1169 = vmatprep.subr.mxu0 %v1073
        %1170 = vmatpush1.msra.mxu0 %v1072
        %1171 = vmatprep.subr.mxu0 %v1075
        %1172 = vmatpush1.msra.mxu0 %v1074
        %1173 = vmatprep.subr.mxu0 %v1077
        %1174 = vmatpush1.msra.mxu0 %v1076
        %1175 = vmatprep.subr.mxu0 %v1079
        %1176 = vmatpush1.msra.mxu0 %v1078
        %1177 = vmatprep.subr.mxu0 %v1081
        %1178 = vmatpush1.msra.mxu0 %v1080
        %1179 = vmatprep.subr.mxu0 %v1083
        %1180 = vmatpush1.msra.mxu0 %v1082
        %1181 = vmatprep.subr.mxu0 %v1085
        %1182 = vmatpush1.msra.mxu0 %v1084
        %1183 = vmatprep.subr.mxu0 %v1087
        %1184 = vmatpush1.msra.mxu0 %v1086
        %1185 = vmatprep.subr.mxu0 %v1089
        %1186 = vmatpush1.msra.mxu0 %v1088
        %1187 = vmatprep.subr.mxu0 %v1091
        %1188 = vmatpush1.msra.mxu0 %v1090
        %1189 = vmatprep.subr.mxu0 %v1093
        %1190 = vmatpush1.msra.mxu0 %v1092
        %1191 = vmatprep.subr.mxu0 %v1095
        %1192 = vmatpush1.msra.mxu0 %v1094
        %1193 = vmatprep.mubr.f32.mxu0 %v1009
        %1194 = vmatmul.mubr.f32.gmra.mrb[0].mxu0 %v1008
        %v1195 = vpop.f32.mrb[0].mxu0
        %v1196 = vadd.f32 0.0, %v1195
        %v1197 = vpop.f32.mrb[0].mxu0
        %v1198 = vadd.f32 0.0, %v1197
        %1199 = vmatprep.mubr.f32.mxu0 %v1012
        %1200 = vmatmul.mubr.f32.gmra.mrb[0].mxu0 %v1011
        %v1201 = vpop.f32.mrb[0].mxu0
        %v1202 = vadd.f32 0.0, %v1201
        %v1203 = vpop.f32.mrb[0].mxu0
        %v1204 = vadd.f32 0.0, %v1203
        %1205 = vmatprep.mubr.f32.mxu0 %v1015
        %1206 = vmatmul.mubr.f32.gmra.mrb[0].mxu0 %v1014
        %v1207 = vpop.f32.mrb[0].mxu0
        %v1208 = vadd.f32 0.0, %v1207
        %v1209 = vpop.f32.mrb[0].mxu0
        %v1210 = vadd.f32 0.0, %v1209
        %1211 = vmatprep.mubr.f32.mxu0 %v1018
        %1212 = vmatmul.mubr.f32.gmra.mrb[0].mxu0 %v1017
        %v1213 = vpop.f32.mrb[0].mxu0
        %v1214 = vadd.f32 0.0, %v1213
        %v1215 = vpop.f32.mrb[0].mxu0
        %v1216 = vadd.f32 0.0, %v1215
        %1217 = vmatprep.mubr.f32.mxu0 %v1021
        %1218 = vmatmul.mubr.f32.gmra.mrb[0].mxu0 %v1020
        %v1219 = vpop.f32.mrb[0].mxu0
        %v1220 = vadd.f32 0.0, %v1219
        %v1221 = vpop.f32.mrb[0].mxu0
        %v1222 = vadd.f32 0.0, %v1221
        %1223 = vmatprep.mubr.f32.mxu0 %v1024
        %1224 = vmatmul.mubr.f32.gmra.mrb[0].mxu0 %v1023
        %v1225 = vpop.f32.mrb[0].mxu0
        %v1226 = vadd.f32 0.0, %v1225
        %v1227 = vpop.f32.mrb[0].mxu0
        %v1228 = vadd.f32 0.0, %v1227
        %1229 = vmatprep.mubr.f32.mxu0 %v1027
        %1230 = vmatmul.mubr.f32.gmra.mrb[0].mxu0 %v1026
        %v1231 = vpop.f32.mrb[0].mxu0
        %v1232 = vadd.f32 0.0, %v1231
        %v1233 = vpop.f32.mrb[0].mxu0
        %v1234 = vadd.f32 0.0, %v1233
        %1235 = vmatprep.mubr.f32.mxu0 %v1030
        %1236 = vmatmul.mubr.f32.gmra.mrb[0].mxu0 %v1029
        %v1237 = vpop.f32.mrb[0].mxu0
        %v1238 = vadd.f32 0.0, %v1237
        %v1239 = vpop.f32.mrb[0].mxu0
        %v1240 = vadd.f32 0.0, %v1239
        %1241 = vdwg.mxu0
        %1242 = vmatprep.subr.mxu0 %v1097
        %1243 = vmatpush1.msra.mxu0 %v1096
        %1244 = vmatprep.subr.mxu0 %v1099
        %1245 = vmatpush1.msra.mxu0 %v1098
        %1246 = vmatprep.subr.mxu0 %v1101
        %1247 = vmatpush1.msra.mxu0 %v1100
        %1248 = vmatprep.subr.mxu0 %v1103
        %1249 = vmatpush1.msra.mxu0 %v1102
        %1250 = vmatprep.subr.mxu0 0.0
        %1251 = vmatpush1.msra.mxu0 0.0
        %1252 = vmatprep.subr.mxu0 0.0
        %1253 = vmatpush1.msra.mxu0 0.0
        %1254 = vmatprep.subr.mxu0 0.0
        %1255 = vmatpush1.msra.mxu0 0.0
        %1256 = vmatprep.subr.mxu0 0.0
        %1257 = vmatpush1.msra.mxu0 0.0
        %1258 = vmatprep.subr.mxu0 0.0
        %1259 = vmatpush1.msra.mxu0 0.0
        %1260 = vmatprep.subr.mxu0 0.0
        %1261 = vmatpush1.msra.mxu0 0.0
        %1262 = vmatprep.subr.mxu0 0.0
        %1263 = vmatpush1.msra.mxu0 0.0
        %1264 = vmatprep.subr.mxu0 0.0
        %1265 = vmatpush1.msra.mxu0 0.0
        %1266 = vmatprep.subr.mxu0 0.0
        %1267 = vmatpush1.msra.mxu0 0.0
        %1268 = vmatprep.subr.mxu0 0.0
        %1269 = vmatpush1.msra.mxu0 0.0
        %1270 = vmatprep.subr.mxu0 0.0
        %1271 = vmatpush1.msra.mxu0 0.0
        %1272 = vmatprep.subr.mxu0 0.0
        %1273 = vmatpush1.msra.mxu0 0.0
        %1274 = vmatprep.subr.mxu0 0.0
        %1275 = vmatpush1.msra.mxu0 0.0
        %1276 = vmatprep.subr.mxu0 0.0
        %1277 = vmatpush1.msra.mxu0 0.0
        %1278 = vmatprep.subr.mxu0 0.0
        %1279 = vmatpush1.msra.mxu0 0.0
        %1280 = vmatprep.subr.mxu0 0.0
        %1281 = vmatpush1.msra.mxu0 0.0
        %1282 = vmatprep.subr.mxu0 0.0
        %1283 = vmatpush1.msra.mxu0 0.0
        %1284 = vmatprep.subr.mxu0 0.0
        %1285 = vmatpush1.msra.mxu0 0.0
        %1286 = vmatprep.subr.mxu0 0.0
        %1287 = vmatpush1.msra.mxu0 0.0
        %1288 = vmatprep.subr.mxu0 0.0
        %1289 = vmatpush1.msra.mxu0 0.0
        %1290 = vmatprep.subr.mxu0 0.0
        %1291 = vmatpush1.msra.mxu0 0.0
        %1292 = vmatprep.subr.mxu0 0.0
        %1293 = vmatpush1.msra.mxu0 0.0
        %1294 = vmatprep.subr.mxu0 0.0
        %1295 = vmatpush1.msra.mxu0 0.0
        %1296 = vmatprep.subr.mxu0 0.0
        %1297 = vmatpush1.msra.mxu0 0.0
        %1298 = vmatprep.subr.mxu0 0.0
        %1299 = vmatpush1.msra.mxu0 0.0
        %1300 = vmatprep.subr.mxu0 0.0
        %1301 = vmatpush1.msra.mxu0 0.0
        %1302 = vmatprep.subr.mxu0 0.0
        %1303 = vmatpush1.msra.mxu0 0.0
        %1304 = vmatprep.subr.mxu0 0.0
        %1305 = vmatpush1.msra.mxu0 0.0
        %1306 = vmatprep.mubr.f32.mxu0 0.0
        %1307 = vmatmul.mubr.f32.gmra.mrb[0].mxu0 %v1106
        %v1308 = vpop.f32.mrb[0].mxu0
        %v1309 = vadd.f32 %v1196, %v1308
        %v1310 = vpop.f32.mrb[0].mxu0
        %v1311 = vadd.f32 %v1198, %v1310
        %1312 = vmatprep.mubr.f32.mxu0 0.0
        %1313 = vmatmul.mubr.f32.gmra.mrb[0].mxu0 %v1109
        %v1314 = vpop.f32.mrb[0].mxu0
        %v1315 = vadd.f32 %v1202, %v1314
        %v1316 = vpop.f32.mrb[0].mxu0
        %v1317 = vadd.f32 %v1204, %v1316
        %1318 = vmatprep.mubr.f32.mxu0 0.0
        %1319 = vmatmul.mubr.f32.gmra.mrb[0].mxu0 %v1112
        %v1320 = vpop.f32.mrb[0].mxu0
        %v1321 = vadd.f32 %v1208, %v1320
        %v1322 = vpop.f32.mrb[0].mxu0
        %v1323 = vadd.f32 %v1210, %v1322
        %1324 = vmatprep.mubr.f32.mxu0 0.0
        %1325 = vmatmul.mubr.f32.gmra.mrb[0].mxu0 %v1115
        %v1326 = vpop.f32.mrb[0].mxu0
        %v1327 = vadd.f32 %v1214, %v1326
        %v1328 = vpop.f32.mrb[0].mxu0
        %v1329 = vadd.f32 %v1216, %v1328
        %1330 = vmatprep.mubr.f32.mxu0 0.0
        %1331 = vmatmul.mubr.f32.gmra.mrb[0].mxu0 %v1118
        %v1332 = vpop.f32.mrb[0].mxu0
        %v1333 = vadd.f32 %v1220, %v1332
        %v1334 = vpop.f32.mrb[0].mxu0
        %v1335 = vadd.f32 %v1222, %v1334
        %1336 = vmatprep.mubr.f32.mxu0 0.0
        %1337 = vmatmul.mubr.f32.gmra.mrb[0].mxu0 %v1121
        %v1338 = vpop.f32.mrb[0].mxu0
        %v1339 = vadd.f32 %v1226, %v1338
        %v1340 = vpop.f32.mrb[0].mxu0
        %v1341 = vadd.f32 %v1228, %v1340
        %1342 = vmatprep.mubr.f32.mxu0 0.0
        %1343 = vmatmul.mubr.f32.gmra.mrb[0].mxu0 %v1124
        %v1344 = vpop.f32.mrb[0].mxu0
        %v1345 = vadd.f32 %v1232, %v1344
        %v1346 = vpop.f32.mrb[0].mxu0
        %v1347 = vadd.f32 %v1234, %v1346
        %1348 = vmatprep.mubr.f32.mxu0 0.0
        %1349 = vmatmul.mubr.f32.gmra.mrb[0].mxu0 %v1127
        %v1350 = vpop.f32.mrb[0].mxu0
        %v1351 = vadd.f32 %v1238, %v1350
        %v1352 = vpop.f32.mrb[0].mxu0
        %v1353 = vadd.f32 %v1240, %v1352
        %1354 = vdwg.mxu0
        %1355 = vmatprep.subr.mxu0 %v1335
        %1356 = vmatpush1.xpose.msra.mxu0 %v1333
        %1357 = vmatprep.subr.mxu0 %v1341
        %1358 = vmatpush1.xpose.msra.mxu0 %v1339
        %1359 = vmatprep.subr.mxu0 0.0
        %1360 = vmatpush1.xpose.msra.mxu0 0.0
        %1361 = vmatprep.subr.mxu0 0.0
        %1362 = vmatpush1.xpose.msra.mxu0 0.0
        %1363 = vmatprep.subr.mxu0 0.0
        %1364 = vmatpush1.xpose.msra.mxu0 0.0
        %1365 = vmatprep.subr.mxu0 0.0
        %1366 = vmatpush1.xpose.msra.mxu0 0.0
        %1367 = vmatprep.subr.mxu0 0.0
        %1368 = vmatpush1.xpose.msra.mxu0 0.0
        %1369 = vmatprep.subr.mxu0 0.0
        %1370 = vmatpush1.xpose.msra.mxu0 0.0
        %1371 = vmatprep.subr.mxu0 0.0
        %1372 = vmatpush1.xpose.msra.mxu0 0.0
        %1373 = vmatprep.subr.mxu0 0.0
        %1374 = vmatpush1.xpose.msra.mxu0 0.0
        %1375 = vmatprep.subr.mxu0 0.0
        %1376 = vmatpush1.xpose.msra.mxu0 0.0
        %1377 = vmatprep.subr.mxu0 0.0
        %1378 = vmatpush1.xpose.msra.mxu0 0.0
        %1379 = vmatprep.subr.mxu0 0.0
        %1380 = vmatpush1.xpose.msra.mxu0 0.0
        %1381 = vmatprep.subr.mxu0 0.0
        %1382 = vmatpush1.xpose.msra.mxu0 0.0
        %1383 = vmatprep.subr.mxu0 0.0
        %1384 = vmatpush1.xpose.msra.mxu0 0.0
        %1385 = vmatprep.subr.mxu0 0.0
        %1386 = vmatpush1.xpose.msra.mxu0 0.0
        %1387 = vmatprep.subr.mxu0 0.0
        %1388 = vmatpush1.xpose.msra.mxu0 0.0
        %1389 = vmatprep.subr.mxu0 0.0
        %1390 = vmatpush1.xpose.msra.mxu0 0.0
        %1391 = vmatprep.subr.mxu0 0.0
        %1392 = vmatpush1.xpose.msra.mxu0 0.0
        %1393 = vmatprep.subr.mxu0 0.0
        %1394 = vmatpush1.xpose.msra.mxu0 0.0
        %1395 = vmatprep.subr.mxu0 0.0
        %1396 = vmatpush1.xpose.msra.mxu0 0.0
        %1397 = vmatprep.subr.mxu0 0.0
        %1398 = vmatpush1.xpose.msra.mxu0 0.0
        %1399 = vmatprep.subr.mxu0 0.0
        %1400 = vmatpush1.xpose.msra.mxu0 0.0
        %1401 = vmatprep.subr.mxu0 0.0
        %1402 = vmatpush1.xpose.msra.mxu0 0.0
        %1403 = vmatprep.subr.mxu0 0.0
        %1404 = vmatpush1.xpose.msra.mxu0 0.0
        %1405 = vmatprep.subr.mxu0 0.0
        %1406 = vmatpush1.xpose.msra.mxu0 0.0
        %1407 = vmatprep.subr.mxu0 0.0
        %1408 = vmatpush1.xpose.msra.mxu0 0.0
        %1409 = vmatprep.subr.mxu0 0.0
        %1410 = vmatpush1.xpose.msra.mxu0 0.0
        %1411 = vmatprep.subr.mxu0 0.0
        %1412 = vmatpush1.xpose.msra.mxu0 0.0
        %1413 = vmatprep.subr.mxu0 0.0
        %1414 = vmatpush1.xpose.msra.mxu0 0.0
        %1415 = vmatprep.subr.mxu0 0.0
        %1416 = vmatpush1.xpose.msra.mxu0 0.0
        %1417 = vmatprep.subr.mxu0 0.0
        %1418 = vmatpush1.xpose.msra.mxu0 0.0
        %1419 = vmatprep.mubr.f32.mxu0 %v1311
        %1420 = vmatmul.mubr.f32.gmra.mrb[0].mxu0 %v1309
        %v1421 = vpop.f32.mrb[0].mxu0
        %v1422 = vadd.f32 0.0, %v1421
        %v1423 = vpop.f32.mrb[0].mxu0
        %1424 = vmatprep.mubr.f32.mxu0 %v1317
        %1425 = vmatmul.mubr.f32.gmra.mrb[0].mxu0 %v1315
        %v1426 = vpop.f32.mrb[0].mxu0
        %v1427 = vadd.f32 0.0, %v1426
        %v1428 = vpop.f32.mrb[0].mxu0
        %1429 = vmatprep.mubr.f32.mxu0 %v1323
        %1430 = vmatmul.mubr.f32.gmra.mrb[0].mxu0 %v1321
        %v1431 = vpop.f32.mrb[0].mxu0
        %v1432 = vadd.f32 0.0, %v1431
        %v1433 = vpop.f32.mrb[0].mxu0
        %1434 = vmatprep.mubr.f32.mxu0 %v1329
        %1435 = vmatmul.mubr.f32.gmra.mrb[0].mxu0 %v1327
        %v1436 = vpop.f32.mrb[0].mxu0
        %v1437 = vadd.f32 0.0, %v1436
        %v1438 = vpop.f32.mrb[0].mxu0
        %1439 = vdwg.mxu0
        %v1440 = vmul.f32 %v1309, %v1309
        %v1441 = vmul.f32 %v1311, %v1311
        %v1442 = vmul.f32 %v1315, %v1315
        %v1443 = vmul.f32 %v1317, %v1317
        %v1444 = vmul.f32 %v1321, %v1321
        %v1445 = vmul.f32 %v1323, %v1323
        %v1446 = vmul.f32 %v1327, %v1327
        %v1447 = vmul.f32 %v1329, %v1329
        %v1448 = vadd.f32 %v1440, %v1441
        %1449 = vadd.xlane.f32.xlu0 %v1448
        %v1450 = vpop.xlane.xlu0 %1449
        %v1451 = vadd.f32 %v1442, %v1443
        %1452 = vadd.xlane.f32.xlu0 %v1451
        %v1453 = vpop.xlane.xlu0 %1452
        %v1454 = vadd.f32 %v1444, %v1445
        %1455 = vadd.xlane.f32.xlu0 %v1454
        %v1456 = vpop.xlane.xlu0 %1455
        %v1457 = vadd.f32 %v1446, %v1447
        %1458 = vadd.xlane.f32.xlu0 %v1457
        %v1459 = vpop.xlane.xlu0 %1458
        %v1460 = vrsqrt.pop %v1450
        %v1461 = vmul.f32 %v1450, %v1460
        %vm1462 = vcmp.eq.f32.partialorder %v1450, inf
        %v1463 = vsel %vm1462, %v1450, %v1461
        %vm1464 = vcmp.eq.f32.partialorder %v1450, 0.0
        %v1465 = vand.u32 %v1450, 2147483648
        %v1466 = vsel %vm1464, %v1465, %v1463
        %v1467 = vrsqrt.pop %v1453
        %v1468 = vmul.f32 %v1453, %v1467
        %vm1469 = vcmp.eq.f32.partialorder %v1453, inf
        %v1470 = vsel %vm1469, %v1453, %v1468
        %vm1471 = vcmp.eq.f32.partialorder %v1453, 0.0
        %v1472 = vand.u32 %v1453, 2147483648
        %v1473 = vsel %vm1471, %v1472, %v1470
        %v1474 = vrsqrt.pop %v1456
        %v1475 = vmul.f32 %v1456, %v1474
        %vm1476 = vcmp.eq.f32.partialorder %v1456, inf
        %v1477 = vsel %vm1476, %v1456, %v1475
        %vm1478 = vcmp.eq.f32.partialorder %v1456, 0.0
        %v1479 = vand.u32 %v1456, 2147483648
        %v1480 = vsel %vm1478, %v1479, %v1477
        %v1481 = vrsqrt.pop %v1459
        %v1482 = vmul.f32 %v1459, %v1481
        %vm1483 = vcmp.eq.f32.partialorder %v1459, inf
        %v1484 = vsel %vm1483, %v1459, %v1482
        %vm1485 = vcmp.eq.f32.partialorder %v1459, 0.0
        %v1486 = vand.u32 %v1459, 2147483648
        %v1487 = vsel %vm1485, %v1486, %v1484
        %v1488 = vmax.f32 %v1466, 1e-12
        %v1489 = vmax.f32 %v1473, 1e-12
        %v1490 = vmax.f32 %v1480, 1e-12
        %v1491 = vmax.f32 %v1487, 1e-12
        %v1492 = vrcp.pop %v1488
        %v1493 = vmul.f32 1.0, %v1492
        %v1494 = vrcp.pop %v1489
        %v1495 = vmul.f32 1.0, %v1494
        %v1496 = vrcp.pop %v1490
        %v1497 = vmul.f32 1.0, %v1496
        %v1498 = vrcp.pop %v1491
        %v1499 = vmul.f32 1.0, %v1498
        %v1500 = vmul.f32 %v1333, %v1333
        %v1501 = vmul.f32 %v1335, %v1335
        %v1502 = vmul.f32 %v1339, %v1339
        %v1503 = vmul.f32 %v1341, %v1341
        %1504 = vmatprep.subr.mxu0 %v1501
        %1505 = vmatpush1.xpose.msra.mxu0 %v1500
        %1506 = vmatprep.subr.mxu0 %v1503
        %1507 = vmatpush1.xpose.msra.mxu0 %v1502
        %1508 = vmatprep.subr.mxu0 0.0
        %1509 = vmatpush1.xpose.msra.mxu0 0.0
        %1510 = vmatprep.subr.mxu0 0.0
        %1511 = vmatpush1.xpose.msra.mxu0 0.0
        %1512 = vmatprep.subr.mxu0 0.0
        %1513 = vmatpush1.xpose.msra.mxu0 0.0
        %1514 = vmatprep.subr.mxu0 0.0
        %1515 = vmatpush1.xpose.msra.mxu0 0.0
        %1516 = vmatprep.subr.mxu0 0.0
        %1517 = vmatpush1.xpose.msra.mxu0 0.0
        %1518 = vmatprep.subr.mxu0 0.0
        %1519 = vmatpush1.xpose.msra.mxu0 0.0
        %1520 = vmatprep.subr.mxu0 0.0
        %1521 = vmatpush1.xpose.msra.mxu0 0.0
        %1522 = vmatprep.subr.mxu0 0.0
        %1523 = vmatpush1.xpose.msra.mxu0 0.0
        %1524 = vmatprep.subr.mxu0 0.0
        %1525 = vmatpush1.xpose.msra.mxu0 0.0
        %1526 = vmatprep.subr.mxu0 0.0
        %1527 = vmatpush1.xpose.msra.mxu0 0.0
        %1528 = vmatprep.subr.mxu0 0.0
        %1529 = vmatpush1.xpose.msra.mxu0 0.0
        %1530 = vmatprep.subr.mxu0 0.0
        %1531 = vmatpush1.xpose.msra.mxu0 0.0
        %1532 = vmatprep.subr.mxu0 0.0
        %1533 = vmatpush1.xpose.msra.mxu0 0.0
        %1534 = vmatprep.subr.mxu0 0.0
        %1535 = vmatpush1.xpose.msra.mxu0 0.0
        %1536 = vmatprep.subr.mxu0 0.0
        %1537 = vmatpush1.xpose.msra.mxu0 0.0
        %1538 = vmatprep.subr.mxu0 0.0
        %1539 = vmatpush1.xpose.msra.mxu0 0.0
        %1540 = vmatprep.subr.mxu0 0.0
        %1541 = vmatpush1.xpose.msra.mxu0 0.0
        %1542 = vmatprep.subr.mxu0 0.0
        %1543 = vmatpush1.xpose.msra.mxu0 0.0
        %1544 = vmatprep.subr.mxu0 0.0
        %1545 = vmatpush1.xpose.msra.mxu0 0.0
        %1546 = vmatprep.subr.mxu0 0.0
        %1547 = vmatpush1.xpose.msra.mxu0 0.0
        %1548 = vmatprep.subr.mxu0 0.0
        %1549 = vmatpush1.xpose.msra.mxu0 0.0
        %1550 = vmatprep.subr.mxu0 0.0
        %1551 = vmatpush1.xpose.msra.mxu0 0.0
        %1552 = vmatprep.subr.mxu0 0.0
        %1553 = vmatpush1.xpose.msra.mxu0 0.0
        %1554 = vmatprep.subr.mxu0 0.0
        %1555 = vmatpush1.xpose.msra.mxu0 0.0
        %1556 = vmatprep.subr.mxu0 0.0
        %1557 = vmatpush1.xpose.msra.mxu0 0.0
        %1558 = vmatprep.subr.mxu0 0.0
        %1559 = vmatpush1.xpose.msra.mxu0 0.0
        %1560 = vmatprep.subr.mxu0 0.0
        %1561 = vmatpush1.xpose.msra.mxu0 0.0
        %1562 = vmatprep.subr.mxu0 0.0
        %1563 = vmatpush1.xpose.msra.mxu0 0.0
        %1564 = vmatprep.subr.mxu0 0.0
        %1565 = vmatpush1.xpose.msra.mxu0 0.0
        %1566 = vmatprep.subr.mxu0 0.0
        %1567 = vmatpush1.xpose.msra.mxu0 0.0
        %1568 = vmatprep.mubr.f32.mxu0 1.0
        %1569 = vmatmul.mubr.f32.gmra.mrb[0].mxu0 1.0
        %v1570 = vpop.f32.mrb[0].mxu0
        %v1571 = vadd.f32 0.0, %v1570
        %v1572 = vpop.f32.mrb[0].mxu0
        %1573 = vdwg.mxu0
        %v1574 = vrsqrt.pop %v1571
        %v1575 = vmul.f32 %v1571, %v1574
        %vm1576 = vcmp.eq.f32.partialorder %v1571, inf
        %v1577 = vsel %vm1576, %v1571, %v1575
        %vm1578 = vcmp.eq.f32.partialorder %v1571, 0.0
        %v1579 = vand.u32 %v1571, 2147483648
        %v1580 = vsel %vm1578, %v1579, %v1577
        %v1581 = vmax.f32 %v1580, 1e-12
        %v1582 = vrcp.pop %v1581
        %v1583 = vmul.f32 1.0, %v1582
        %v1584 = vld [vmem:[#allocation12] sm:$0xff]
        %v1585 = vld [vmem:[#allocation12 + $0x8] sm:$0xff]
        %v1586 = vld [vmem:[#allocation12 + $0x10] sm:$0xff]
        %v1587 = vld [vmem:[#allocation12 + $0x18] sm:$0xff]
        %v1588 = vmul.f32 %v1493, %v1584
        %v1589 = vmul.f32 %v1495, %v1585
        %v1590 = vmul.f32 %v1497, %v1586
        %v1591 = vmul.f32 %v1499, %v1587
        %1593 = vset.pattern.permute.xlu0 0
        %1594 = vperm.xlu0 %1593, %v1588
        %v1595 = vpop.permute.xlu0 %1594
        %1598 = vset.pattern.permute.xlu0 0
        %1599 = vperm.xlu0 %1598, %v1589
        %v1600 = vpop.permute.xlu0 %1599
        %1603 = vset.pattern.permute.xlu0 0
        %1604 = vperm.xlu0 %1603, %v1590
        %v1605 = vpop.permute.xlu0 %1604
        %1608 = vset.pattern.permute.xlu0 0
        %1609 = vperm.xlu0 %1608, %v1591
        %v1610 = vpop.permute.xlu0 %1609
        %v1612 = vmul.f32 %v1422, %v1595
        %v1613 = vmul.f32 %v1427, %v1600
        %v1614 = vmul.f32 %v1432, %v1605
        %v1615 = vmul.f32 %v1437, %v1610
        %v1616 = vlaneseq
        %v1617 = vshrl.u32 %v1616, 7
        %v1618 = vsub.s32 0, %v1617
        %v1619 = vrot.slane %v1583, %v1618
        %v1620 = vmul.f32 %v1612, %v1619
        %v1621 = vmul.f32 %v1613, %v1619
        %v1622 = vmul.f32 %v1614, %v1619
        %v1623 = vmul.f32 %v1615, %v1619
        %v1624 = vld [vmem:[#allocation14] sm:$0xff]
        %v1625 = vld [vmem:[#allocation14 + $0x8] sm:$0xff]
        %v1626 = vld [vmem:[#allocation14 + $0x10] sm:$0xff]
        %v1627 = vld [vmem:[#allocation14 + $0x18] sm:$0xff]
        %v1628 = vadd.f32 %v1620, %v1624
        %v1629 = vadd.f32 %v1621, %v1625
        %v1630 = vadd.f32 %v1622, %v1626
        %v1631 = vadd.f32 %v1623, %v1627
        %vm1632 = vcmask 130048
        %v1633 = vsel %vm1632, %v1628, -inf
        %1634 = vmax.xlane.f32.xlu0 %v1633
        %v1635 = vpop.xlane.xlu0 %1634
        %v1636 = vsel %vm1632, %v1629, -inf
        %1637 = vmax.xlane.f32.xlu0 %v1636
        %v1638 = vpop.xlane.xlu0 %1637
        %v1639 = vsel %vm1632, %v1630, -inf
        %1640 = vmax.xlane.f32.xlu0 %v1639
        %v1641 = vpop.xlane.xlu0 %1640
        %v1642 = vsel %vm1632, %v1631, -inf
        %1643 = vmax.xlane.f32.xlu0 %v1642
        %v1644 = vpop.xlane.xlu0 %1643
        %v1645 = vsub.f32 %v1628, %v1635
        %v1646 = vsub.f32 %v1629, %v1638
        %v1647 = vsub.f32 %v1630, %v1641
        %v1648 = vsub.f32 %v1631, %v1644
        %v1649 = vmul.f32 %v1645, 1.442695
        %v1650 = vpow.pop %v1649
        %v1651 = vmul.f32 %v1646, 1.442695
        %v1652 = vpow.pop %v1651
        %v1653 = vmul.f32 %v1647, 1.442695
        %v1654 = vpow.pop %v1653
        %v1655 = vmul.f32 %v1648, 1.442695
        %v1656 = vpow.pop %v1655
        %v1657 = vsel %vm1632, %v1650, 0.0
        %1658 = vadd.xlane.f32.xlu0 %v1657
        %v1659 = vpop.xlane.xlu0 %1658
        %v1660 = vsel %vm1632, %v1652, 0.0
        %1661 = vadd.xlane.f32.xlu0 %v1660
        %v1662 = vpop.xlane.xlu0 %1661
        %v1663 = vsel %vm1632, %v1654, 0.0
        %1664 = vadd.xlane.f32.xlu0 %v1663
        %v1665 = vpop.xlane.xlu0 %1664
        %v1666 = vsel %vm1632, %v1656, 0.0
        %1667 = vadd.xlane.f32.xlu0 %v1666
        %v1668 = vpop.xlane.xlu0 %1667
        %v1669 = vrcp.pop %v1659
        %v1670 = vmul.f32 1.0, %v1669
        %v1671 = vrcp.pop %v1662
        %v1672 = vmul.f32 1.0, %v1671
        %v1673 = vrcp.pop %v1665
        %v1674 = vmul.f32 1.0, %v1673
        %v1675 = vrcp.pop %v1668
        %v1676 = vmul.f32 1.0, %v1675
        %v1677 = vmul.f32 %v1650, %v1670
        %v1678 = vmul.f32 %v1652, %v1672
        %v1679 = vmul.f32 %v1654, %v1674
        %v1680 = vmul.f32 %v1656, %v1676
        %v1682 = vsel %vm1632, %v1677, 0
        %v1685 = vsel %vm1632, %v1678, 0
        %v1688 = vsel %vm1632, %v1679, 0
        %v1691 = vsel %vm1632, %v1680, 0
        %1693 = vmatprep.subr.mxu0 %v1347
        %1694 = vmatpush1.msra.mxu0 %v1345
        %1695 = vmatprep.subr.mxu0 %v1353
        %1696 = vmatpush1.msra.mxu0 %v1351
        %1697 = vmatprep.subr.mxu0 0.0
        %1698 = vmatpush1.msra.mxu0 0.0
        %1699 = vmatprep.subr.mxu0 0.0
        %1700 = vmatpush1.msra.mxu0 0.0
        %1701 = vmatprep.subr.mxu0 0.0
        %1702 = vmatpush1.msra.mxu0 0.0
        %1703 = vmatprep.subr.mxu0 0.0
        %1704 = vmatpush1.msra.mxu0 0.0
        %1705 = vmatprep.subr.mxu0 0.0
        %1706 = vmatpush1.msra.mxu0 0.0
        %1707 = vmatprep.subr.mxu0 0.0
        %1708 = vmatpush1.msra.mxu0 0.0
        %1709 = vmatprep.subr.mxu0 0.0
        %1710 = vmatpush1.msra.mxu0 0.0
        %1711 = vmatprep.subr.mxu0 0.0
        %1712 = vmatpush1.msra.mxu0 0.0
        %1713 = vmatprep.subr.mxu0 0.0
        %1714 = vmatpush1.msra.mxu0 0.0
        %1715 = vmatprep.subr.mxu0 0.0
        %1716 = vmatpush1.msra.mxu0 0.0
        %1717 = vmatprep.subr.mxu0 0.0
        %1718 = vmatpush1.msra.mxu0 0.0
        %1719 = vmatprep.subr.mxu0 0.0
        %1720 = vmatpush1.msra.mxu0 0.0
        %1721 = vmatprep.subr.mxu0 0.0
        %1722 = vmatpush1.msra.mxu0 0.0
        %1723 = vmatprep.subr.mxu0 0.0
        %1724 = vmatpush1.msra.mxu0 0.0
        %1725 = vmatprep.subr.mxu0 0.0
        %1726 = vmatpush1.msra.mxu0 0.0
        %1727 = vmatprep.subr.mxu0 0.0
        %1728 = vmatpush1.msra.mxu0 0.0
        %1729 = vmatprep.subr.mxu0 0.0
        %1730 = vmatpush1.msra.mxu0 0.0
        %1731 = vmatprep.subr.mxu0 0.0
        %1732 = vmatpush1.msra.mxu0 0.0
        %1733 = vmatprep.subr.mxu0 0.0
        %1734 = vmatpush1.msra.mxu0 0.0
        %1735 = vmatprep.subr.mxu0 0.0
        %1736 = vmatpush1.msra.mxu0 0.0
        %1737 = vmatprep.subr.mxu0 0.0
        %1738 = vmatpush1.msra.mxu0 0.0
        %1739 = vmatprep.subr.mxu0 0.0
        %1740 = vmatpush1.msra.mxu0 0.0
        %1741 = vmatprep.subr.mxu0 0.0
        %1742 = vmatpush1.msra.mxu0 0.0
        %1743 = vmatprep.subr.mxu0 0.0
        %1744 = vmatpush1.msra.mxu0 0.0
        %1745 = vmatprep.subr.mxu0 0.0
        %1746 = vmatpush1.msra.mxu0 0.0
        %1747 = vmatprep.subr.mxu0 0.0
        %1748 = vmatpush1.msra.mxu0 0.0
        %1749 = vmatprep.subr.mxu0 0.0
        %1750 = vmatpush1.msra.mxu0 0.0
        %1751 = vmatprep.subr.mxu0 0.0
        %1752 = vmatpush1.msra.mxu0 0.0
        %1753 = vmatprep.subr.mxu0 0.0
        %1754 = vmatpush1.msra.mxu0 0.0
        %1755 = vmatprep.subr.mxu0 0.0
        %1756 = vmatpush1.msra.mxu0 0.0
        %1757 = vmatprep.mubr.f32.mxu0 0.0
        %1758 = vmatmul.mubr.f32.gmra.mrb[0].mxu0 %v1682
        %v1759 = vpop.f32.mrb[0].mxu0
        %v1760 = vadd.f32 0.0, %v1759
        %v1761 = vpop.f32.mrb[0].mxu0
        %v1762 = vadd.f32 0.0, %v1761
        %1763 = vmatprep.mubr.f32.mxu0 0.0
        %1764 = vmatmul.mubr.f32.gmra.mrb[0].mxu0 %v1685
        %v1765 = vpop.f32.mrb[0].mxu0
        %v1766 = vadd.f32 0.0, %v1765
        %v1767 = vpop.f32.mrb[0].mxu0
        %v1768 = vadd.f32 0.0, %v1767
        %1769 = vmatprep.mubr.f32.mxu0 0.0
        %1770 = vmatmul.mubr.f32.gmra.mrb[0].mxu0 %v1688
        %v1771 = vpop.f32.mrb[0].mxu0
        %v1772 = vadd.f32 0.0, %v1771
        %v1773 = vpop.f32.mrb[0].mxu0
        %v1774 = vadd.f32 0.0, %v1773
        %1775 = vmatprep.mubr.f32.mxu0 0.0
        %1776 = vmatmul.mubr.f32.gmra.mrb[0].mxu0 %v1691
        %v1777 = vpop.f32.mrb[0].mxu0
        %v1778 = vadd.f32 0.0, %v1777
        %v1779 = vpop.f32.mrb[0].mxu0
        %v1780 = vadd.f32 0.0, %v1779
        %1781 = vdwg.mxu0
        %v1782 = vld [vmem:[#allocation15] sm:$0xff]
        %v1783 = vld [vmem:[#allocation15 + $0x8] sm:$0xff]
        %v1784 = vld [vmem:[#allocation15 + $0x10] sm:$0xff]
        %v1785 = vld [vmem:[#allocation15 + $0x18] sm:$0xff]
        %v1787 = vsel %vm1104, %v1782, 0
        %v1790 = vsel %vm1104, %v1783, 0
        %v1793 = vsel %vm1104, %v1784, 0
        %v1796 = vsel %vm1104, %v1785, 0
        %1798 = vmatprep.subr.mxu0 %v1762
        %1799 = vmatpush1.msra.mxu0 %v1760
        %1800 = vmatprep.subr.mxu0 %v1768
        %1801 = vmatpush1.msra.mxu0 %v1766
        %1802 = vmatprep.subr.mxu0 %v1774
        %1803 = vmatpush1.msra.mxu0 %v1772
        %1804 = vmatprep.subr.mxu0 %v1780
        %1805 = vmatpush1.msra.mxu0 %v1778
        %1806 = vmatprep.subr.mxu0 0.0
        %1807 = vmatpush1.msra.mxu0 0.0
        %1808 = vmatprep.subr.mxu0 0.0
        %1809 = vmatpush1.msra.mxu0 0.0
        %1810 = vmatprep.subr.mxu0 0.0
        %1811 = vmatpush1.msra.mxu0 0.0
        %1812 = vmatprep.subr.mxu0 0.0
        %1813 = vmatpush1.msra.mxu0 0.0
        %1814 = vmatprep.subr.mxu0 0.0
        %1815 = vmatpush1.msra.mxu0 0.0
        %1816 = vmatprep.subr.mxu0 0.0
        %1817 = vmatpush1.msra.mxu0 0.0
        %1818 = vmatprep.subr.mxu0 0.0
        %1819 = vmatpush1.msra.mxu0 0.0
        %1820 = vmatprep.subr.mxu0 0.0
        %1821 = vmatpush1.msra.mxu0 0.0
        %1822 = vmatprep.subr.mxu0 0.0
        %1823 = vmatpush1.msra.mxu0 0.0
        %1824 = vmatprep.subr.mxu0 0.0
        %1825 = vmatpush1.msra.mxu0 0.0
        %1826 = vmatprep.subr.mxu0 0.0
        %1827 = vmatpush1.msra.mxu0 0.0
        %1828 = vmatprep.subr.mxu0 0.0
        %1829 = vmatpush1.msra.mxu0 0.0
        %1830 = vmatprep.subr.mxu0 0.0
        %1831 = vmatpush1.msra.mxu0 0.0
        %1832 = vmatprep.subr.mxu0 0.0
        %1833 = vmatpush1.msra.mxu0 0.0
        %1834 = vmatprep.subr.mxu0 0.0
        %1835 = vmatpush1.msra.mxu0 0.0
        %1836 = vmatprep.subr.mxu0 0.0
        %1837 = vmatpush1.msra.mxu0 0.0
        %1838 = vmatprep.subr.mxu0 0.0
        %1839 = vmatpush1.msra.mxu0 0.0
        %1840 = vmatprep.subr.mxu0 0.0
        %1841 = vmatpush1.msra.mxu0 0.0
        %1842 = vmatprep.subr.mxu0 0.0
        %1843 = vmatpush1.msra.mxu0 0.0
        %1844 = vmatprep.subr.mxu0 0.0
        %1845 = vmatpush1.msra.mxu0 0.0
        %1846 = vmatprep.subr.mxu0 0.0
        %1847 = vmatpush1.msra.mxu0 0.0
        %1848 = vmatprep.subr.mxu0 0.0
        %1849 = vmatpush1.msra.mxu0 0.0
        %1850 = vmatprep.subr.mxu0 0.0
        %1851 = vmatpush1.msra.mxu0 0.0
        %1852 = vmatprep.subr.mxu0 0.0
        %1853 = vmatpush1.msra.mxu0 0.0
        %1854 = vmatprep.subr.mxu0 0.0
        %1855 = vmatpush1.msra.mxu0 0.0
        %1856 = vmatprep.subr.mxu0 0.0
        %1857 = vmatpush1.msra.mxu0 0.0
        %1858 = vmatprep.subr.mxu0 0.0
        %1859 = vmatpush1.msra.mxu0 0.0
        %1860 = vmatprep.subr.mxu0 0.0
        %1861 = vmatpush1.msra.mxu0 0.0
        %1862 = vmatprep.mubr.f32.mxu0 0.0
        %1863 = vmatmul.mubr.f32.gmra.mrb[0].mxu0 %v1787
        %v1864 = vpop.f32.mrb[0].mxu0
        %v1865 = vadd.f32 0.0, %v1864
        %v1866 = vpop.f32.mrb[0].mxu0
        %v1867 = vadd.f32 0.0, %v1866
        %1868 = vmatprep.mubr.f32.mxu0 0.0
        %1869 = vmatmul.mubr.f32.gmra.mrb[0].mxu0 %v1790
        %v1870 = vpop.f32.mrb[0].mxu0
        %v1871 = vadd.f32 0.0, %v1870
        %v1872 = vpop.f32.mrb[0].mxu0
        %v1873 = vadd.f32 0.0, %v1872
        %1874 = vmatprep.mubr.f32.mxu0 0.0
        %1875 = vmatmul.mubr.f32.gmra.mrb[0].mxu0 %v1793
        %v1876 = vpop.f32.mrb[0].mxu0
        %v1877 = vadd.f32 0.0, %v1876
        %v1878 = vpop.f32.mrb[0].mxu0
        %v1879 = vadd.f32 0.0, %v1878
        %1880 = vmatprep.mubr.f32.mxu0 0.0
        %1881 = vmatmul.mubr.f32.gmra.mrb[0].mxu0 %v1796
        %v1882 = vpop.f32.mrb[0].mxu0
        %v1883 = vadd.f32 0.0, %v1882
        %v1884 = vpop.f32.mrb[0].mxu0
        %v1885 = vadd.f32 0.0, %v1884
        %1886 = vdwg.mxu0
        %1887 = vst [vmem:[%s425] sm:$0xff] %v1865
        %1888 = vst [vmem:[%s425 + $0x8] sm:$0xff] %v1867
        %1889 = vst [vmem:[%s425 + $0x10] sm:$0xff] %v1871
        %1890 = vst [vmem:[%s425 + $0x18] sm:$0xff] %v1873
        %1891 = vst [vmem:[%s425 + $0x20] sm:$0xff] %v1877
        %1892 = vst [vmem:[%s425 + $0x28] sm:$0xff] %v1879
        %1893 = vst [vmem:[%s425 + $0x30] sm:$0xff] %v1883
        %1894 = vst [vmem:[%s425 + $0x38] sm:$0xff] %v1885
        %s1895 = sand.u32 %s210, 1
        %s1896 = scalar_lea.sflag [#allocation5], %s1895
        %s1897 = sand.u32 %s210, 1
        %s1898 = smul.addr %s1897, 64
        %s1899 = scalar_lea.vmem [#allocation17], %s1898
        // Predicated region
        $region85: #{sgqa_forward.1} parent=51 // pred_check
          %p1900 = pneg %p220
        $region86: #{sgqa_forward.1} parent=51 // pred_check_branch
          %1902 = sbr.rel (%p1900) target = $region88
        $region87: #{sgqa_forward.1} parent=51 // pred_region
          %s1904 = ssub.s32 1024, 1024
          %1905 = vsyncadd %s1896, %s1904
          %s1906 = smul.addr %s29, 8
          %s1907 = smul.addr %s1906, 128
          %s1908 = scalar_lea.hbm %s8, %s1907
          %s1909 = sshll.u32 %s1899, 4
          %s1910 = int_to_ptr.vmem [resolvable:$true] %s1909
          %1915 = dma.vmem_to_hbm [thread:$0]  %s1910, 1024, %s1908, %s1896, 256, 256, 16
        $region88: #{sgqa_forward.1} parent=51 // pred_fallthru
          _
      $region52: #{sgqa_forward.1} parent=5 // pred_fallthru
        _
      %p1916 = scmp.le.s32.totalorder 2, %s24
      // Predicated region
      $region89: #{sgqa_forward.1} parent=5 // pred_check
        %p1917 = pneg %p1916
      $region90: #{sgqa_forward.1} parent=5 // pred_check_branch
        %1919 = sbr.rel (%p1917) target = $region92
      $region91: #{sgqa_forward.1} parent=5 // pred_region
        %s1920 = ssub.s32 %s24, 2
        // Predicated region
        $region93: #{sgqa_forward.1} parent=91 // pred_check
          %p1921 = pneg %p226
        $region94: #{sgqa_forward.1} parent=91 // pred_check_branch
          %1923 = sbr.rel (%p1921) target = $region96
        $region95: #{sgqa_forward.1} parent=91 // pred_region
          %s1924 = sand.u32 %s211, 1
          %s1925 = scalar_lea.sflag [#allocation5], %s1924
          %s1926 = sand.u32 %s211, 1
          %s1927 = smul.addr %s1926, 64
          %s1928 = scalar_lea.vmem [#allocation17], %s1927
          %1929 = dma.done %s1925, 1024
        $region96: #{sgqa_forward.1} parent=91 // pred_fallthru
          _
      $region92: #{sgqa_forward.1} parent=5 // pred_fallthru
        _
    $region6: #{sgqa_forward.1} parent=1 // loop_footer
      %s28 = sadd.s32 1, %s24
    $region7: #{sgqa_forward.1} parent=1 // loop_footer_branch
      %23 = sbr.rel target = $region3
    $region8: #{sgqa_forward.1} parent=1 // loop_exit
      _
    %1930 = vsyncpa [#allocation4], 1
    %s1931 = scalar_lea.sflag [#allocation4], 1
    %1932 = vsyncpa %s1931, 1
    %1933 = vsyncpa [#allocation7], 1
    %1934 = vsyncpa [#allocation10], 1
    %1935 = vsyncpa [#allocation13], 1
    %1936 = vsyncpa [#allocation16], 1
    %1937 = vsyncpa [#allocation5], 1
    %s1938 = scalar_lea.sflag [#allocation5], 1
    %1939 = vsyncpa %s1938, 1

</llo_original>
